<compile_context>
chip_gen: v7x
topology: tpu7x:2x2x1
jax: 0.10.0
libtpu: 0.0.40
codegen_flags: <defaults>
</compile_context>

<pallas_src>
import functools
import math

import jax
import jax.numpy as jnp
from jax import lax
from jax.experimental import pallas as pl
from jax.experimental.pallas import tpu as pltpu


def _round_up(x, m):
    return (x + m - 1) // m * m


# --------------------------------------------------------------------------
# Pallas kernel 1: streaming DIBR-style rasterizer
# --------------------------------------------------------------------------
# Per-face coefficient layout (NCOEF = 25 + 3*C rows, faces along last axis):
#   0..2  : a0, b0, c0     w0 = a0*px + b0*py + c0
#   3..5  : a1, b1, c1     w1 = a1*px + b1*py + c1        (w2 = 1 - w0 - w1)
#   6..8  : az, bz, cz     z  = az*px + bz*py + cz        (camera-space z plane)
#   9     : front flag     1.0 if front-facing and non-degenerate else 0.0
#   10..10+3C-1 : per-channel feature plane (af, bf, cf)
#   10+3C..     : 3 edges x (ax, ay, ex, ey, 1/len^2) for the soft silhouette
_COEF_BASE = 10
_TILE_H = 8      # sublane-aligned pixel tile height
_TILE_W = 128    # lane-aligned pixel tile width


def _raster_kernel(coef_ref, feat_ref, mask_ref, idx_ref, bz_ref, *,
                   n_faces, fchunk, n_channels, sigmainv,
                   img_h, img_w, tile_h, tile_w):
    b = pl.program_id(0)
    f_blk = pl.program_id(3)

    # Pixel centres of this tile in NDC (y up), same convention as before.
    # TODO(synk): exact kaolin pixel-center / y-flip convention not verified.
    row0 = pl.program_id(1) * tile_h
    col0 = pl.program_id(2) * tile_w
    rows = row0 + lax.broadcasted_iota(jnp.int32, (tile_h, tile_w), 0)
    cols = col0 + lax.broadcasted_iota(jnp.int32, (tile_h, tile_w), 1)
    px = (cols.astype(jnp.float32) + 0.5) * (2.0 / img_w) - 1.0
    py = 1.0 - (rows.astype(jnp.float32) + 0.5) * (2.0 / img_h)

    @pl.when(f_blk == 0)
    def _init():
        bz_ref[...] = jnp.full((tile_h, tile_w), -1e30, jnp.float32)
        idx_ref[0] = jnp.full((tile_h, tile_w), n_faces, jnp.int32)
        mask_ref[0] = jnp.ones((tile_h, tile_w), jnp.float32)
        feat_ref[0] = jnp.zeros((n_channels, tile_h, tile_w), jnp.float32)

    best_z = bz_ref[...]
    best_i = idx_ref[0]
    macc = mask_ref[0]
    feats = tuple(feat_ref[0, c] for c in range(n_channels))

    base = f_blk * fchunk
    edge_off = _COEF_BASE + 3 * n_channels

    def body(i, carry):
        best_z, best_i, macc = carry[0], carry[1], carry[2]
        feats = carry[3:]
        face = base + i

        def cf(k):
            return coef_ref[b, k, face]          # scalar read from SMEM

        # Barycentric / z planes: pure FMAs, divides were folded in on host.
        w0 = cf(0) * px + cf(1) * py + cf(2)
        w1 = cf(3) * px + cf(4) * py + cf(5)
        w2 = 1.0 - w0 - w1
        inside = (w0 >= 0.0) & (w1 >= 0.0) & (w2 >= 0.0)
        zint = cf(6) * px + cf(7) * py + cf(8)
        front = cf(9)

        # Z-buffer update (camera looks along -z: closest face has largest z).
        win = inside & (front > 0.5) & (zint > best_z)
        best_z = jnp.where(win, zint, best_z)
        best_i = jnp.where(win, face, best_i)
        new_feats = []
        for c in range(n_channels):
            fc = (cf(_COEF_BASE + 3 * c) * px
                  + cf(_COEF_BASE + 3 * c + 1) * py
                  + cf(_COEF_BASE + 3 * c + 2))
            new_feats.append(jnp.where(win, fc, feats[c]))

        # Soft silhouette: squared distance to the closest triangle edge.
        # TODO(synk): kaolin restricts to knum=30 nearest faces in a boxlen
        # window with its `multiplier` rescaling; here all front faces
        # contribute with distances in NDC units (same as the v1 kernel).
        d2 = None
        for e in range(3):
            o = edge_off + 5 * e
            ax = cf(o); ay = cf(o + 1)
            ex = cf(o + 2); ey = cf(o + 3); il2 = cf(o + 4)
            tx = px - ax
            ty = py - ay
            t = jnp.clip((tx * ex + ty * ey) * il2, 0.0, 1.0)
            dx = tx - t * ex
            dy = ty - t * ey
            d2e = dx * dx + dy * dy
            d2 = d2e if d2 is None else jnp.minimum(d2, d2e)

        prob = jnp.where(inside, 1.0, jnp.exp(-sigmainv * d2)) * front
        macc = macc * (1.0 - prob)               # running prod of (1 - p_f)
        return (best_z, best_i, macc) + tuple(new_feats)

    carry = lax.fori_loop(0, fchunk, body, (best_z, best_i, macc) + feats)
    bz_ref[...] = carry[0]
    idx_ref[0] = carry[1]
    mask_ref[0] = carry[2]
    for c in range(n_channels):
        feat_ref[0, c] = carry[3 + c]

    @pl.when(f_blk == pl.num_programs(3) - 1)
    def _finalize():
        mask_ref[0] = 1.0 - mask_ref[0]
        idx_ref[0] = jnp.where(idx_ref[0] >= n_faces, -1, idx_ref[0])


def _face_coefficients(face_vertices_image, face_vertices_z, face_features,
                       face_normals_z):
    """(B,NF,3,2),(B,NF,3),(B,NF,3,C),(B,NF) -> (B, 25+3C, NF) float32."""
    x0 = face_vertices_image[..., 0, 0]; y0 = face_vertices_image[..., 0, 1]
    x1 = face_vertices_image[..., 1, 0]; y1 = face_vertices_image[..., 1, 1]
    x2 = face_vertices_image[..., 2, 0]; y2 = face_vertices_image[..., 2, 1]
    z0 = face_vertices_z[..., 0]
    z1 = face_vertices_z[..., 1]
    z2 = face_vertices_z[..., 2]

    denom = (y1 - y2) * (x0 - x2) + (x2 - x1) * (y0 - y2)
    degenerate = jnp.abs(denom) < 1e-9
    inv_den = jnp.where(degenerate, 0.0, 1.0 / jnp.where(degenerate, 1.0, denom))
    a0 = (y1 - y2) * inv_den
    b0 = (x2 - x1) * inv_den
    c0 = -(a0 * x2 + b0 * y2)
    a1 = (y2 - y0) * inv_den
    b1 = (x0 - x2) * inv_den
    c1 = -(a1 * x2 + b1 * y2)
    az = (z0 - z2) * a0 + (z1 - z2) * a1
    bz = (z0 - z2) * b0 + (z1 - z2) * b1
    cz = (z0 - z2) * c0 + (z1 - z2) * c1 + z2
    front = jnp.where((face_normals_z > 0.0) & jnp.logical_not(degenerate),
                      1.0, 0.0)

    coefs = [a0, b0, c0, a1, b1, c1, az, bz, cz, front]

    f0 = face_features[..., 0, :]
    f1 = face_features[..., 1, :]
    f2 = face_features[..., 2, :]
    n_channels = face_features.shape[-1]
    for c in range(n_channels):
        d0 = f0[..., c] - f2[..., c]
        d1 = f1[..., c] - f2[..., c]
        coefs += [d0 * a0 + d1 * a1,
                  d0 * b0 + d1 * b1,
                  d0 * c0 + d1 * c1 + f2[..., c]]

    for (xa, ya, xb, yb) in ((x0, y0, x1, y1), (x1, y1, x2, y2), (x2, y2, x0, y0)):
        ex = xb - xa
        ey = yb - ya
        il2 = 1.0 / jnp.maximum(ex * ex + ey * ey, 1e-12)
        coefs += [xa, ya, ex, ey, il2]

    return jnp.stack(coefs, axis=1).astype(jnp.float32)


def dibr_rasterize(face_vertices_image, face_vertices_z, face_features,
                   face_normals_z, height, width, sigmainv):
    B, NF = face_vertices_z.shape[:2]
    C = face_features.shape[-1]

    coef = _face_coefficients(face_vertices_image, face_vertices_z,
                              face_features, face_normals_z)

    # Face chunking (streaming grid axis).  Padded faces have front=0.
    fchunk = _round_up(NF, 8) if NF <= 512 else 512
    nf_pad = _round_up(NF, fchunk)
    n_chunks = nf_pad // fchunk
    if nf_pad > NF:
        coef = jnp.pad(coef, ((0, 0), (0, 0), (0, nf_pad - NF)))

    h_pad = _round_up(height, _TILE_H)
    w_pad = _round_up(width, _TILE_W)
    grid = (B, h_pad // _TILE_H, w_pad // _TILE_W, n_chunks)

    kern = functools.partial(
        _raster_kernel, n_faces=NF, fchunk=fchunk, n_channels=C,
        sigmainv=float(sigmainv), img_h=height, img_w=width,
        tile_h=_TILE_H, tile_w=_TILE_W)

    feat, mask, idx = pl.pallas_call(
        kern,
        out_shape=(jax.ShapeDtypeStruct((B, C, h_pad, w_pad), jnp.float32),
                   jax.ShapeDtypeStruct((B, h_pad, w_pad), jnp.float32),
                   jax.ShapeDtypeStruct((B, h_pad, w_pad), jnp.int32)),
        grid=grid,
        # TODO(synk): for very large meshes, chunk the face table into SMEM
        # with a blocked BlockSpec instead of keeping it whole-array resident.
        in_specs=[pl.BlockSpec(memory_space=pltpu.MemorySpace.SMEM)],
        out_specs=(pl.BlockSpec((1, C, _TILE_H, _TILE_W),
                                lambda b, i, j, f: (b, 0, i, j)),
                   pl.BlockSpec((1, _TILE_H, _TILE_W),
                                lambda b, i, j, f: (b, i, j)),
                   pl.BlockSpec((1, _TILE_H, _TILE_W),
                                lambda b, i, j, f: (b, i, j))),
        scratch_shapes=[pltpu.VMEM((_TILE_H, _TILE_W), jnp.float32)],
        compiler_params=pltpu.CompilerParams(
            dimension_semantics=("parallel", "parallel", "parallel",
                                 "arbitrary"),
            vmem_limit_bytes=32 * 1024 * 1024),
    )(coef)

    return (feat[:, :, :height, :width],
            mask[:, :height, :width],
            idx[:, :height, :width])


# --------------------------------------------------------------------------
# Pallas kernel 2: erosion with all-ones kernel == separable k x k min-pool
# --------------------------------------------------------------------------
def _erosion_kernel(pad_ref, out_ref, *, ksize):
    _, H, W = out_ref.shape
    p = pad_ref[0]                        # (H + k - 1, W + k - 1)
    # Separable: horizontal k-window min, then vertical k-window min (2k ops).
    tmp = p[:, 0:W]
    for dx in range(1, ksize):
        tmp = jnp.minimum(tmp, p[:, dx:dx + W])
    res = tmp[0:H, :]
    for dy in range(1, ksize):
        res = jnp.minimum(res, tmp[dy:dy + H, :])
    out_ref[0] = res


def erode_mask(mask, ksize):
    B, H, W = mask.shape
    pad_lo = ksize // 2
    pad_hi = ksize - 1 - pad_lo
    # Geodesic border: padding never wins the min.
    # TODO(synk): fuse erosion into the rasterizer epilogue (halo'd pixel
    # tiles + pltpu.roll shifts) to avoid this extra HBM round trip.
    padded = jnp.pad(mask, ((0, 0), (pad_lo, pad_hi), (pad_lo, pad_hi)),
                     constant_values=1e4)
    kern = functools.partial(_erosion_kernel, ksize=ksize)
    return pl.pallas_call(
        kern,
        out_shape=jax.ShapeDtypeStruct((B, H, W), jnp.float32),
        grid=(B,),
        in_specs=[pl.BlockSpec((1, H + ksize - 1, W + ksize - 1),
                               lambda b: (b, 0, 0))],
        out_specs=pl.BlockSpec((1, H, W), lambda b: (b, 0, 0)),
        compiler_params=pltpu.CompilerParams(
            dimension_semantics=("parallel",)),
    )(padded)


# --------------------------------------------------------------------------
# JAX glue reproducing the module's geometry setup
# --------------------------------------------------------------------------
def quaternion_to_rotation_matrix(q):
    """q: (B, 4) in WXYZ order (kornia QuaternionCoeffOrder.WXYZ)."""
    q = q / jnp.linalg.norm(q, axis=-1, keepdims=True)
    w, x, y, z = q[:, 0], q[:, 1], q[:, 2], q[:, 3]
    r00 = 1 - 2 * (y * y + z * z); r01 = 2 * (x * y - w * z); r02 = 2 * (x * z + w * y)
    r10 = 2 * (x * y + w * z); r11 = 1 - 2 * (x * x + z * z); r12 = 2 * (y * z - w * x)
    r20 = 2 * (x * z - w * y); r21 = 2 * (y * z + w * x); r22 = 1 - 2 * (x * x + y * y)
    return jnp.stack([jnp.stack([r00, r01, r02], -1),
                      jnp.stack([r10, r11, r12], -1),
                      jnp.stack([r20, r21, r22], -1)], -2)


def rotate_translate_points(points, rot, trans):
    """points (B,V,3), rot (B,3,3), trans (B,3): R @ (p - t)."""
    return jnp.einsum('bij,bvj->bvi', rot, points - trans[:, None, :])


def generate_perspective_projection(fovy, ratio):
    tanfov = math.tan(fovy / 2.0)
    return jnp.array([1.0 / (ratio * tanfov), 1.0 / tanfov, -1.0], jnp.float32)


def generate_camera_rotation(cam_pos, look_at, up):
    z = cam_pos - look_at
    z = z / jnp.linalg.norm(z, axis=-1, keepdims=True)
    x = jnp.cross(up, z)
    x = x / jnp.linalg.norm(x, axis=-1, keepdims=True)
    y = jnp.cross(z, x)
    return jnp.stack([x, y, z], axis=-2)          # (1, 3, 3)


def prepare_vertices(vertices, faces, camera_rot, camera_trans, camera_proj):
    v_cam = rotate_translate_points(vertices, camera_rot, camera_trans)
    proj = v_cam * camera_proj[None, None, :]
    v_img = proj[..., :2] / proj[..., 2:3]
    face_vertices_cam = v_cam[:, faces]           # (B, NF, 3, 3)
    face_vertices_img = v_img[:, faces]           # (B, NF, 3, 2)
    e1 = face_vertices_cam[:, :, 1] - face_vertices_cam[:, :, 0]
    e2 = face_vertices_cam[:, :, 2] - face_vertices_cam[:, :, 0]
    n = jnp.cross(e1, e2)
    n = n / (jnp.linalg.norm(n, axis=-1, keepdims=True) + 1e-12)
    return face_vertices_cam, face_vertices_img, n


class RenderingKaolinPallas:
    def __init__(self, config, faces, width, height):
        self.config = config
        self.width = width
        self.height = height
        self.camera_proj = generate_perspective_projection(1.57 / 2, width / height)
        self.camera_trans = jnp.array([[0.0, 0.0, config['camera_distance']]],
                                      jnp.float32)
        self.obj_center = jnp.zeros((1, 3), jnp.float32)
        up = jnp.array([[0.0, 1.0, 0.0]], jnp.float32)
        self.camera_rot = generate_camera_rotation(self.camera_trans,
                                                   self.obj_center, up)
        self.faces = jnp.asarray(faces, jnp.int32)

    def forward(self, translation, quaternion, unit_vertices, face_features,
                texture_maps=None, render_depth=False):
        if texture_maps is not None or render_depth:
            # TODO(synk): texture_mapping (bilinear grid-sample) and the
            # render_depth gather path are not implemented.
            raise NotImplementedError
        B, F = quaternion.shape[:2]
        C = face_features.shape[-1]

        # All frames batched together -> a single rasterizer pallas_call.
        rot = quaternion_to_rotation_matrix(quaternion.reshape(B * F, 4))
        rot = rot.reshape(B, F, 3, 3)
        verts = jnp.einsum('bfij,bvj->bfvi', rot,
                           unit_vertices - self.obj_center[:, None, :])
        verts = verts + jnp.transpose(translation, (0, 2, 1))[:, :, None, :]
        verts = verts.reshape(B * F, -1, 3)

        cam_rot = jnp.broadcast_to(self.camera_rot, (B * F, 3, 3))
        cam_trans = jnp.broadcast_to(self.camera_trans, (B * F, 3))
        fvc, fvi, fn = prepare_vertices(verts, self.faces, cam_rot, cam_trans,
                                        self.camera_proj)
        face_vertices_z = fvc[..., -1]            # (B*F, NF, 3)
        face_normals_z = fn[..., -1]              # (B*F, NF)

        ff = jnp.broadcast_to(face_features[:, None],
                              (B, F) + face_features.shape[1:])
        ff = ff.reshape((B * F,) + face_features.shape[1:])

        feat, ren_mask, red_index = dibr_rasterize(
            fvi, face_vertices_z, ff, face_normals_z,
            self.height, self.width, self.config['sigmainv'])

        if self.config['erode_renderer_mask'] > 0:
            ren_mask = erode_mask(ren_mask, self.config['erode_renderer_mask'])

        rgba = jnp.concatenate([feat, ren_mask[:, None]], axis=1)  # (B*F,C+1,H,W)
        return rgba.reshape(B, F, 1, C + 1, self.height, self.width)


# --------------------------------------------------------------------------
# Demo
# --------------------------------------------------------------------------
if __name__ == "__main__":
    key = jax.random.PRNGKey(0)
    B, F, H, W, C = 1, 2, 16, 16, 3

    # Unit cube mesh (8 vertices, 12 triangles, outward winding).
    cube_vertices = jnp.array(
        [[-0.5, -0.5, -0.5], [0.5, -0.5, -0.5], [0.5, 0.5, -0.5], [-0.5, 0.5, -0.5],
         [-0.5, -0.5, 0.5], [0.5, -0.5, 0.5], [0.5, 0.5, 0.5], [-0.5, 0.5, 0.5]],
        jnp.float32)
    cube_faces = [[4, 5, 6], [4, 6, 7],      # +z
                  [1, 0, 3], [1, 3, 2],      # -z
                  [5, 1, 2], [5, 2, 6],      # +x
                  [0, 4, 7], [0, 7, 3],      # -x
                  [7, 6, 2], [7, 2, 3],      # +y
                  [0, 1, 5], [0, 5, 4]]      # -y
    NF = len(cube_faces)

    config = {'camera_distance': 2.0, 'sigmainv': 7000.0,
              'erode_renderer_mask': 3, 'texture_size': 64}
    renderer = RenderingKaolinPallas(config, cube_faces, W, H)

    k1, k2, k3 = jax.random.split(key, 3)
    translation = 0.05 * jax.random.normal(k1, (B, 3, F), jnp.float32)
    quaternion = jax.random.normal(k2, (B, F, 4), jnp.float32)
    unit_vertices = cube_vertices[None]                              # (B, V, 3)
    face_features = jax.random.uniform(k3, (B, NF, 3, C), jnp.float32)

    out = renderer.forward(translation, quaternion, unit_vertices, face_features)
    out = jax.block_until_ready(out)
    assert out.shape == (B, F, 1, C + 1, H, W)
    assert bool(jnp.all(jnp.isfinite(out)))
    print("KERNEL_OK")
</pallas_src>

<mosaic_0001>
module attributes {stable_mosaic.version = 11 : i64} {
  func.func @_raster_kernel(%arg0: i32, %arg1: i32, %arg2: i32, %arg3: i32, %arg4: memref<2x34x16xf32, #tpu.memory_space<smem>>, %arg5: memref<1x3x8x128xf32, #tpu.memory_space<vmem>>, %arg6: memref<1x8x128xf32, #tpu.memory_space<vmem>>, %arg7: memref<1x8x128xi32, #tpu.memory_space<vmem>>, %arg8: memref<8x128xf32, #tpu.memory_space<vmem>>) attributes {dimension_semantics = [#tpu.dimension_semantics<parallel>, #tpu.dimension_semantics<parallel>, #tpu.dimension_semantics<parallel>, #tpu.dimension_semantics<arbitrary>], iteration_bounds = array<i64: 2, 2, 1, 1>, scalar_prefetch = 0 : i64, scratch_operands = 1 : i64, tpu.core_type = #tpu.core_type<tc>, window_params = [{transform_indices = @transform_0, window_bounds = array<i64: 2, 34, 16>}, {transform_indices = @transform_1, window_bounds = array<i64: 1, 3, 8, 128>}, {transform_indices = @transform_2, window_bounds = array<i64: 1, 8, 128>}, {transform_indices = @transform_3, window_bounds = array<i64: 1, 8, 128>}]} {
    %c8_i32 = arith.constant 8 : i32
    %0 = arith.muli %arg1, %c8_i32 : i32
    %c128_i32 = arith.constant 128 : i32
    %1 = arith.muli %arg2, %c128_i32 : i32
    %2 = tpu.iota {dimensions = array<i32: 0>} : vector<8x128xi32>
    %3 = vector.broadcast %0 : i32 to vector<8x128xi32>
    %4 = arith.addi %3, %2 : vector<8x128xi32>
    %5 = tpu.iota {dimensions = array<i32: 1>} : vector<8x128xi32>
    %6 = vector.broadcast %1 : i32 to vector<8x128xi32>
    %7 = arith.addi %6, %5 : vector<8x128xi32>
    %8 = arith.sitofp %7 : vector<8x128xi32> to vector<8x128xf32>
    %cst = arith.constant 5.000000e-01 : f32
    %9 = vector.broadcast %cst : f32 to vector<8x128xf32>
    %10 = arith.addf %8, %9 : vector<8x128xf32>
    %cst_0 = arith.constant 1.250000e-01 : f32
    %11 = vector.broadcast %cst_0 : f32 to vector<8x128xf32>
    %12 = arith.mulf %10, %11 : vector<8x128xf32>
    %cst_1 = arith.constant 1.000000e+00 : f32
    %13 = vector.broadcast %cst_1 : f32 to vector<8x128xf32>
    %14 = arith.subf %12, %13 : vector<8x128xf32>
    %15 = arith.sitofp %4 : vector<8x128xi32> to vector<8x128xf32>
    %cst_2 = arith.constant 5.000000e-01 : f32
    %16 = vector.broadcast %cst_2 : f32 to vector<8x128xf32>
    %17 = arith.addf %15, %16 : vector<8x128xf32>
    %cst_3 = arith.constant 1.250000e-01 : f32
    %18 = vector.broadcast %cst_3 : f32 to vector<8x128xf32>
    %19 = arith.mulf %17, %18 : vector<8x128xf32>
    %cst_4 = arith.constant 1.000000e+00 : f32
    %20 = vector.broadcast %cst_4 : f32 to vector<8x128xf32>
    %21 = arith.subf %20, %19 : vector<8x128xf32>
    %c0_i32 = arith.constant 0 : i32
    %22 = arith.cmpi eq, %arg3, %c0_i32 : i32
    %23 = arith.extui %22 : i1 to i32
    %c0_i32_5 = arith.constant 0 : i32
    %24 = arith.cmpi ne, %23, %c0_i32_5 : i32
    scf.if %24 {
      %cst_48 = arith.constant -1.000000e+30 : f32
      %58 = vector.broadcast %cst_48 : f32 to vector<8x128xf32>
      %c0_49 = arith.constant 0 : index
      %c0_50 = arith.constant 0 : index
      %59 = vector.load %arg8[%c0_49, %c0_50] : memref<8x128xf32, #tpu.memory_space<vmem>>, vector<8x128xf32>
      tpu.vector_store %arg8[%c0_49, %c0_50], %58 {strides = array<i32>} : memref<8x128xf32, #tpu.memory_space<vmem>>, vector<8x128xf32>,
      %c12_i32 = arith.constant 12 : i32
      %60 = vector.broadcast %c12_i32 : i32 to vector<8x128xi32>
      %c0_51 = arith.constant 0 : index
      %c0_52 = arith.constant 0 : index
      %c0_53 = arith.constant 0 : index
      %61 = vector.load %arg7[%c0_51, %c0_52, %c0_53] : memref<1x8x128xi32, #tpu.memory_space<vmem>>, vector<1x8x128xi32>
      %62 = vector.shape_cast %61 : vector<1x8x128xi32> to vector<8x128xi32>
      %63 = vector.shape_cast %60 : vector<8x128xi32> to vector<1x8x128xi32>
      tpu.vector_store %arg7[%c0_51, %c0_52, %c0_53], %63 {strides = array<i32>} : memref<1x8x128xi32, #tpu.memory_space<vmem>>, vector<1x8x128xi32>,
      %cst_54 = arith.constant 1.000000e+00 : f32
      %64 = vector.broadcast %cst_54 : f32 to vector<8x128xf32>
      %c0_55 = arith.constant 0 : index
      %c0_56 = arith.constant 0 : index
      %c0_57 = arith.constant 0 : index
      %65 = vector.load %arg6[%c0_55, %c0_56, %c0_57] : memref<1x8x128xf32, #tpu.memory_space<vmem>>, vector<1x8x128xf32>
      %66 = vector.shape_cast %65 : vector<1x8x128xf32> to vector<8x128xf32>
      %67 = vector.shape_cast %64 : vector<8x128xf32> to vector<1x8x128xf32>
      tpu.vector_store %arg6[%c0_55, %c0_56, %c0_57], %67 {strides = array<i32>} : memref<1x8x128xf32, #tpu.memory_space<vmem>>, vector<1x8x128xf32>,
      %cst_58 = arith.constant 0.000000e+00 : f32
      %68 = vector.broadcast %cst_58 : f32 to vector<3x8x128xf32>
      %c0_59 = arith.constant 0 : index
      %c0_60 = arith.constant 0 : index
      %c0_61 = arith.constant 0 : index
      %c0_62 = arith.constant 0 : index
      %69 = vector.load %arg5[%c0_59, %c0_60, %c0_61, %c0_62] : memref<1x3x8x128xf32, #tpu.memory_space<vmem>>, vector<1x3x8x128xf32>
      %70 = vector.shape_cast %69 : vector<1x3x8x128xf32> to vector<3x8x128xf32>
      %71 = vector.shape_cast %68 : vector<3x8x128xf32> to vector<1x3x8x128xf32>
      tpu.vector_store %arg5[%c0_59, %c0_60, %c0_61, %c0_62], %71 {strides = array<i32>} : memref<1x3x8x128xf32, #tpu.memory_space<vmem>>, vector<1x3x8x128xf32>,
    } else {
    }
    %c0 = arith.constant 0 : index
    %c0_6 = arith.constant 0 : index
    %25 = vector.load %arg8[%c0, %c0_6] : memref<8x128xf32, #tpu.memory_space<vmem>>, vector<8x128xf32>
    %c0_7 = arith.constant 0 : index
    %c0_8 = arith.constant 0 : index
    %c0_9 = arith.constant 0 : index
    %26 = vector.load %arg7[%c0_7, %c0_8, %c0_9] : memref<1x8x128xi32, #tpu.memory_space<vmem>>, vector<1x8x128xi32>
    %27 = vector.shape_cast %26 : vector<1x8x128xi32> to vector<8x128xi32>
    %c0_10 = arith.constant 0 : index
    %c0_11 = arith.constant 0 : index
    %c0_12 = arith.constant 0 : index
    %28 = vector.load %arg6[%c0_10, %c0_11, %c0_12] : memref<1x8x128xf32, #tpu.memory_space<vmem>>, vector<1x8x128xf32>
    %29 = vector.shape_cast %28 : vector<1x8x128xf32> to vector<8x128xf32>
    %c0_13 = arith.constant 0 : index
    %c0_14 = arith.constant 0 : index
    %c0_15 = arith.constant 0 : index
    %c0_16 = arith.constant 0 : index
    %30 = vector.load %arg5[%c0_13, %c0_14, %c0_15, %c0_16] : memref<1x3x8x128xf32, #tpu.memory_space<vmem>>, vector<1x1x8x128xf32>
    %31 = vector.shape_cast %30 : vector<1x1x8x128xf32> to vector<8x128xf32>
    %c0_17 = arith.constant 0 : index
    %c1 = arith.constant 1 : index
    %c0_18 = arith.constant 0 : index
    %c0_19 = arith.constant 0 : index
    %32 = vector.load %arg5[%c0_17, %c1, %c0_18, %c0_19] : memref<1x3x8x128xf32, #tpu.memory_space<vmem>>, vector<1x1x8x128xf32>
    %33 = vector.shape_cast %32 : vector<1x1x8x128xf32> to vector<8x128xf32>
    %c0_20 = arith.constant 0 : index
    %c2 = arith.constant 2 : index
    %c0_21 = arith.constant 0 : index
    %c0_22 = arith.constant 0 : index
    %34 = vector.load %arg5[%c0_20, %c2, %c0_21, %c0_22] : memref<1x3x8x128xf32, #tpu.memory_space<vmem>>, vector<1x1x8x128xf32>
    %35 = vector.shape_cast %34 : vector<1x1x8x128xf32> to vector<8x128xf32>
    %c16_i32 = arith.constant 16 : i32
    %36 = arith.muli %arg3, %c16_i32 : i32
    %c0_i32_23 = arith.constant 0 : i32
    %c16_i32_24 = arith.constant 16 : i32
    %37 = arith.addi %c0_i32_23, %c16_i32_24 : i32
    %c1_i32 = arith.constant 1 : i32
    %38:6 = scf.for %arg9 = %c0_i32_23 to %37 step %c1_i32 iter_args(%arg10 = %25, %arg11 = %27, %arg12 = %29, %arg13 = %31, %arg14 = %33, %arg15 = %35) -> (vector<8x128xf32>, vector<8x128xi32>, vector<8x128xf32>, vector<8x128xf32>, vector<8x128xf32>, vector<8x128xf32>)  : i32 {
      %58 = arith.addi %36, %arg9 : i32
      %59 = arith.index_cast %arg0 : i32 to index
      %c0_48 = arith.constant 0 : index
      %60 = arith.index_cast %58 : i32 to index
      %61 = memref.load %arg4[%59, %c0_48, %60] : memref<2x34x16xf32, #tpu.memory_space<smem>>
      %62 = vector.broadcast %61 : f32 to vector<8x128xf32>
      %63 = arith.mulf %62, %14 : vector<8x128xf32>
      %64 = arith.index_cast %arg0 : i32 to index
      %c1_49 = arith.constant 1 : index
      %65 = arith.index_cast %58 : i32 to index
      %66 = memref.load %arg4[%64, %c1_49, %65] : memref<2x34x16xf32, #tpu.memory_space<smem>>
      %67 = vector.broadcast %66 : f32 to vector<8x128xf32>
      %68 = arith.mulf %67, %21 : vector<8x128xf32>
      %69 = arith.addf %63, %68 : vector<8x128xf32>
      %70 = arith.index_cast %arg0 : i32 to index
      %c2_50 = arith.constant 2 : index
      %71 = arith.index_cast %58 : i32 to index
      %72 = memref.load %arg4[%70, %c2_50, %71] : memref<2x34x16xf32, #tpu.memory_space<smem>>
      %73 = vector.broadcast %72 : f32 to vector<8x128xf32>
      %74 = arith.addf %69, %73 : vector<8x128xf32>
      %75 = arith.index_cast %arg0 : i32 to index
      %c3 = arith.constant 3 : index
      %76 = arith.index_cast %58 : i32 to index
      %77 = memref.load %arg4[%75, %c3, %76] : memref<2x34x16xf32, #tpu.memory_space<smem>>
      %78 = vector.broadcast %77 : f32 to vector<8x128xf32>
      %79 = arith.mulf %78, %14 : vector<8x128xf32>
      %80 = arith.index_cast %arg0 : i32 to index
      %c4 = arith.constant 4 : index
      %81 = arith.index_cast %58 : i32 to index
      %82 = memref.load %arg4[%80, %c4, %81] : memref<2x34x16xf32, #tpu.memory_space<smem>>
      %83 = vector.broadcast %82 : f32 to vector<8x128xf32>
      %84 = arith.mulf %83, %21 : vector<8x128xf32>
      %85 = arith.addf %79, %84 : vector<8x128xf32>
      %86 = arith.index_cast %arg0 : i32 to index
      %c5 = arith.constant 5 : index
      %87 = arith.index_cast %58 : i32 to index
      %88 = memref.load %arg4[%86, %c5, %87] : memref<2x34x16xf32, #tpu.memory_space<smem>>
      %89 = vector.broadcast %88 : f32 to vector<8x128xf32>
      %90 = arith.addf %85, %89 : vector<8x128xf32>
      %cst_51 = arith.constant 1.000000e+00 : f32
      %91 = vector.broadcast %cst_51 : f32 to vector<8x128xf32>
      %92 = arith.subf %91, %74 : vector<8x128xf32>
      %93 = arith.subf %92, %90 : vector<8x128xf32>
      %cst_52 = arith.constant 0.000000e+00 : f32
      %94 = vector.broadcast %cst_52 : f32 to vector<8x128xf32>
      %95 = arith.cmpf oge, %74, %94 : vector<8x128xf32>
      %cst_53 = arith.constant 0.000000e+00 : f32
      %96 = vector.broadcast %cst_53 : f32 to vector<8x128xf32>
      %97 = arith.cmpf oge, %90, %96 : vector<8x128xf32>
      %98 = arith.andi %95, %97 : vector<8x128xi1>
      %cst_54 = arith.constant 0.000000e+00 : f32
      %99 = vector.broadcast %cst_54 : f32 to vector<8x128xf32>
      %100 = arith.cmpf oge, %93, %99 : vector<8x128xf32>
      %101 = arith.andi %98, %100 : vector<8x128xi1>
      %102 = arith.index_cast %arg0 : i32 to index
      %c6 = arith.constant 6 : index
      %103 = arith.index_cast %58 : i32 to index
      %104 = memref.load %arg4[%102, %c6, %103] : memref<2x34x16xf32, #tpu.memory_space<smem>>
      %105 = vector.broadcast %104 : f32 to vector<8x128xf32>
      %106 = arith.mulf %105, %14 : vector<8x128xf32>
      %107 = arith.index_cast %arg0 : i32 to index
      %c7 = arith.constant 7 : index
      %108 = arith.index_cast %58 : i32 to index
      %109 = memref.load %arg4[%107, %c7, %108] : memref<2x34x16xf32, #tpu.memory_space<smem>>
      %110 = vector.broadcast %109 : f32 to vector<8x128xf32>
      %111 = arith.mulf %110, %21 : vector<8x128xf32>
      %112 = arith.addf %106, %111 : vector<8x128xf32>
      %113 = arith.index_cast %arg0 : i32 to index
      %c8 = arith.constant 8 : index
      %114 = arith.index_cast %58 : i32 to index
      %115 = memref.load %arg4[%113, %c8, %114] : memref<2x34x16xf32, #tpu.memory_space<smem>>
      %116 = vector.broadcast %115 : f32 to vector<8x128xf32>
      %117 = arith.addf %112, %116 : vector<8x128xf32>
      %118 = arith.index_cast %arg0 : i32 to index
      %c9 = arith.constant 9 : index
      %119 = arith.index_cast %58 : i32 to index
      %120 = memref.load %arg4[%118, %c9, %119] : memref<2x34x16xf32, #tpu.memory_space<smem>>
      %cst_55 = arith.constant 5.000000e-01 : f32
      %121 = arith.cmpf ogt, %120, %cst_55 : f32
      %122 = vector.broadcast %121 : i1 to vector<8x128xi1>
      %123 = arith.andi %101, %122 : vector<8x128xi1>
      %124 = arith.cmpf ogt, %117, %arg10 : vector<8x128xf32>
      %125 = arith.andi %123, %124 : vector<8x128xi1>
      %126 = arith.select %125, %117, %arg10 : vector<8x128xi1>, vector<8x128xf32>
      %127 = vector.broadcast %58 : i32 to vector<8x128xi32>
      %128 = arith.select %125, %127, %arg11 : vector<8x128xi1>, vector<8x128xi32>
      %129 = arith.index_cast %arg0 : i32 to index
      %c10 = arith.constant 10 : index
      %130 = arith.index_cast %58 : i32 to index
      %131 = memref.load %arg4[%129, %c10, %130] : memref<2x34x16xf32, #tpu.memory_space<smem>>
      %132 = vector.broadcast %131 : f32 to vector<8x128xf32>
      %133 = arith.mulf %132, %14 : vector<8x128xf32>
      %134 = arith.index_cast %arg0 : i32 to index
      %c11 = arith.constant 11 : index
      %135 = arith.index_cast %58 : i32 to index
      %136 = memref.load %arg4[%134, %c11, %135] : memref<2x34x16xf32, #tpu.memory_space<smem>>
      %137 = vector.broadcast %136 : f32 to vector<8x128xf32>
      %138 = arith.mulf %137, %21 : vector<8x128xf32>
      %139 = arith.addf %133, %138 : vector<8x128xf32>
      %140 = arith.index_cast %arg0 : i32 to index
      %c12 = arith.constant 12 : index
      %141 = arith.index_cast %58 : i32 to index
      %142 = memref.load %arg4[%140, %c12, %141] : memref<2x34x16xf32, #tpu.memory_space<smem>>
      %143 = vector.broadcast %142 : f32 to vector<8x128xf32>
      %144 = arith.addf %139, %143 : vector<8x128xf32>
      %145 = arith.select %125, %144, %arg13 : vector<8x128xi1>, vector<8x128xf32>
      %146 = arith.index_cast %arg0 : i32 to index
      %c13 = arith.constant 13 : index
      %147 = arith.index_cast %58 : i32 to index
      %148 = memref.load %arg4[%146, %c13, %147] : memref<2x34x16xf32, #tpu.memory_space<smem>>
      %149 = vector.broadcast %148 : f32 to vector<8x128xf32>
      %150 = arith.mulf %149, %14 : vector<8x128xf32>
      %151 = arith.index_cast %arg0 : i32 to index
      %c14 = arith.constant 14 : index
      %152 = arith.index_cast %58 : i32 to index
      %153 = memref.load %arg4[%151, %c14, %152] : memref<2x34x16xf32, #tpu.memory_space<smem>>
      %154 = vector.broadcast %153 : f32 to vector<8x128xf32>
      %155 = arith.mulf %154, %21 : vector<8x128xf32>
      %156 = arith.addf %150, %155 : vector<8x128xf32>
      %157 = arith.index_cast %arg0 : i32 to index
      %c15 = arith.constant 15 : index
      %158 = arith.index_cast %58 : i32 to index
      %159 = memref.load %arg4[%157, %c15, %158] : memref<2x34x16xf32, #tpu.memory_space<smem>>
      %160 = vector.broadcast %159 : f32 to vector<8x128xf32>
      %161 = arith.addf %156, %160 : vector<8x128xf32>
      %162 = arith.select %125, %161, %arg14 : vector<8x128xi1>, vector<8x128xf32>
      %163 = arith.index_cast %arg0 : i32 to index
      %c16 = arith.constant 16 : index
      %164 = arith.index_cast %58 : i32 to index
      %165 = memref.load %arg4[%163, %c16, %164] : memref<2x34x16xf32, #tpu.memory_space<smem>>
      %166 = vector.broadcast %165 : f32 to vector<8x128xf32>
      %167 = arith.mulf %166, %14 : vector<8x128xf32>
      %168 = arith.index_cast %arg0 : i32 to index
      %c17 = arith.constant 17 : index
      %169 = arith.index_cast %58 : i32 to index
      %170 = memref.load %arg4[%168, %c17, %169] : memref<2x34x16xf32, #tpu.memory_space<smem>>
      %171 = vector.broadcast %170 : f32 to vector<8x128xf32>
      %172 = arith.mulf %171, %21 : vector<8x128xf32>
      %173 = arith.addf %167, %172 : vector<8x128xf32>
      %174 = arith.index_cast %arg0 : i32 to index
      %c18 = arith.constant 18 : index
      %175 = arith.index_cast %58 : i32 to index
      %176 = memref.load %arg4[%174, %c18, %175] : memref<2x34x16xf32, #tpu.memory_space<smem>>
      %177 = vector.broadcast %176 : f32 to vector<8x128xf32>
      %178 = arith.addf %173, %177 : vector<8x128xf32>
      %179 = arith.select %125, %178, %arg15 : vector<8x128xi1>, vector<8x128xf32>
      %180 = arith.index_cast %arg0 : i32 to index
      %c19 = arith.constant 19 : index
      %181 = arith.index_cast %58 : i32 to index
      %182 = memref.load %arg4[%180, %c19, %181] : memref<2x34x16xf32, #tpu.memory_space<smem>>
      %183 = arith.index_cast %arg0 : i32 to index
      %c20 = arith.constant 20 : index
      %184 = arith.index_cast %58 : i32 to index
      %185 = memref.load %arg4[%183, %c20, %184] : memref<2x34x16xf32, #tpu.memory_space<smem>>
      %186 = arith.index_cast %arg0 : i32 to index
      %c21 = arith.constant 21 : index
      %187 = arith.index_cast %58 : i32 to index
      %188 = memref.load %arg4[%186, %c21, %187] : memref<2x34x16xf32, #tpu.memory_space<smem>>
      %189 = arith.index_cast %arg0 : i32 to index
      %c22 = arith.constant 22 : index
      %190 = arith.index_cast %58 : i32 to index
      %191 = memref.load %arg4[%189, %c22, %190] : memref<2x34x16xf32, #tpu.memory_space<smem>>
      %192 = arith.index_cast %arg0 : i32 to index
      %c23 = arith.constant 23 : index
      %193 = arith.index_cast %58 : i32 to index
      %194 = memref.load %arg4[%192, %c23, %193] : memref<2x34x16xf32, #tpu.memory_space<smem>>
      %195 = vector.broadcast %182 : f32 to vector<8x128xf32>
      %196 = arith.subf %14, %195 : vector<8x128xf32>
      %197 = vector.broadcast %185 : f32 to vector<8x128xf32>
      %198 = arith.subf %21, %197 : vector<8x128xf32>
      %199 = vector.broadcast %188 : f32 to vector<8x128xf32>
      %200 = arith.mulf %196, %199 : vector<8x128xf32>
      %201 = vector.broadcast %191 : f32 to vector<8x128xf32>
      %202 = arith.mulf %198, %201 : vector<8x128xf32>
      %203 = arith.addf %200, %202 : vector<8x128xf32>
      %204 = vector.broadcast %194 : f32 to vector<8x128xf32>
      %205 = arith.mulf %203, %204 : vector<8x128xf32>
      %cst_56 = arith.constant 0.000000e+00 : f32
      %cst_57 = arith.constant 1.000000e+00 : f32
      %206 = vector.broadcast %cst_56 : f32 to vector<8x128xf32>
      %207 = arith.maximumf %206, %205 : vector<8x128xf32>
      %208 = vector.broadcast %cst_57 : f32 to vector<8x128xf32>
      %209 = arith.minimumf %208, %207 : vector<8x128xf32>
      %210 = vector.broadcast %188 : f32 to vector<8x128xf32>
      %211 = arith.mulf %209, %210 : vector<8x128xf32>
      %212 = arith.subf %196, %211 : vector<8x128xf32>
      %213 = vector.broadcast %191 : f32 to vector<8x128xf32>
      %214 = arith.mulf %209, %213 : vector<8x128xf32>
      %215 = arith.subf %198, %214 : vector<8x128xf32>
      %216 = arith.mulf %212, %212 : vector<8x128xf32>
      %217 = arith.mulf %215, %215 : vector<8x128xf32>
      %218 = arith.addf %216, %217 : vector<8x128xf32>
      %219 = arith.index_cast %arg0 : i32 to index
      %c24 = arith.constant 24 : index
      %220 = arith.index_cast %58 : i32 to index
      %221 = memref.load %arg4[%219, %c24, %220] : memref<2x34x16xf32, #tpu.memory_space<smem>>
      %222 = arith.index_cast %arg0 : i32 to index
      %c25 = arith.constant 25 : index
      %223 = arith.index_cast %58 : i32 to index
      %224 = memref.load %arg4[%222, %c25, %223] : memref<2x34x16xf32, #tpu.memory_space<smem>>
      %225 = arith.index_cast %arg0 : i32 to index
      %c26 = arith.constant 26 : index
      %226 = arith.index_cast %58 : i32 to index
      %227 = memref.load %arg4[%225, %c26, %226] : memref<2x34x16xf32, #tpu.memory_space<smem>>
      %228 = arith.index_cast %arg0 : i32 to index
      %c27 = arith.constant 27 : index
      %229 = arith.index_cast %58 : i32 to index
      %230 = memref.load %arg4[%228, %c27, %229] : memref<2x34x16xf32, #tpu.memory_space<smem>>
      %231 = arith.index_cast %arg0 : i32 to index
      %c28 = arith.constant 28 : index
      %232 = arith.index_cast %58 : i32 to index
      %233 = memref.load %arg4[%231, %c28, %232] : memref<2x34x16xf32, #tpu.memory_space<smem>>
      %234 = vector.broadcast %221 : f32 to vector<8x128xf32>
      %235 = arith.subf %14, %234 : vector<8x128xf32>
      %236 = vector.broadcast %224 : f32 to vector<8x128xf32>
      %237 = arith.subf %21, %236 : vector<8x128xf32>
      %238 = vector.broadcast %227 : f32 to vector<8x128xf32>
      %239 = arith.mulf %235, %238 : vector<8x128xf32>
      %240 = vector.broadcast %230 : f32 to vector<8x128xf32>
      %241 = arith.mulf %237, %240 : vector<8x128xf32>
      %242 = arith.addf %239, %241 : vector<8x128xf32>
      %243 = vector.broadcast %233 : f32 to vector<8x128xf32>
      %244 = arith.mulf %242, %243 : vector<8x128xf32>
      %cst_58 = arith.constant 0.000000e+00 : f32
      %cst_59 = arith.constant 1.000000e+00 : f32
      %245 = vector.broadcast %cst_58 : f32 to vector<8x128xf32>
      %246 = arith.maximumf %245, %244 : vector<8x128xf32>
      %247 = vector.broadcast %cst_59 : f32 to vector<8x128xf32>
      %248 = arith.minimumf %247, %246 : vector<8x128xf32>
      %249 = vector.broadcast %227 : f32 to vector<8x128xf32>
      %250 = arith.mulf %248, %249 : vector<8x128xf32>
      %251 = arith.subf %235, %250 : vector<8x128xf32>
      %252 = vector.broadcast %230 : f32 to vector<8x128xf32>
      %253 = arith.mulf %248, %252 : vector<8x128xf32>
      %254 = arith.subf %237, %253 : vector<8x128xf32>
      %255 = arith.mulf %251, %251 : vector<8x128xf32>
      %256 = arith.mulf %254, %254 : vector<8x128xf32>
      %257 = arith.addf %255, %256 : vector<8x128xf32>
      %258 = arith.minimumf %218, %257 : vector<8x128xf32>
      %259 = arith.index_cast %arg0 : i32 to index
      %c29 = arith.constant 29 : index
      %260 = arith.index_cast %58 : i32 to index
      %261 = memref.load %arg4[%259, %c29, %260] : memref<2x34x16xf32, #tpu.memory_space<smem>>
      %262 = arith.index_cast %arg0 : i32 to index
      %c30 = arith.constant 30 : index
      %263 = arith.index_cast %58 : i32 to index
      %264 = memref.load %arg4[%262, %c30, %263] : memref<2x34x16xf32, #tpu.memory_space<smem>>
      %265 = arith.index_cast %arg0 : i32 to index
      %c31 = arith.constant 31 : index
      %266 = arith.index_cast %58 : i32 to index
      %267 = memref.load %arg4[%265, %c31, %266] : memref<2x34x16xf32, #tpu.memory_space<smem>>
      %268 = arith.index_cast %arg0 : i32 to index
      %c32 = arith.constant 32 : index
      %269 = arith.index_cast %58 : i32 to index
      %270 = memref.load %arg4[%268, %c32, %269] : memref<2x34x16xf32, #tpu.memory_space<smem>>
      %271 = arith.index_cast %arg0 : i32 to index
      %c33 = arith.constant 33 : index
      %272 = arith.index_cast %58 : i32 to index
      %273 = memref.load %arg4[%271, %c33, %272] : memref<2x34x16xf32, #tpu.memory_space<smem>>
      %274 = vector.broadcast %261 : f32 to vector<8x128xf32>
      %275 = arith.subf %14, %274 : vector<8x128xf32>
      %276 = vector.broadcast %264 : f32 to vector<8x128xf32>
      %277 = arith.subf %21, %276 : vector<8x128xf32>
      %278 = vector.broadcast %267 : f32 to vector<8x128xf32>
      %279 = arith.mulf %275, %278 : vector<8x128xf32>
      %280 = vector.broadcast %270 : f32 to vector<8x128xf32>
      %281 = arith.mulf %277, %280 : vector<8x128xf32>
      %282 = arith.addf %279, %281 : vector<8x128xf32>
      %283 = vector.broadcast %273 : f32 to vector<8x128xf32>
      %284 = arith.mulf %282, %283 : vector<8x128xf32>
      %cst_60 = arith.constant 0.000000e+00 : f32
      %cst_61 = arith.constant 1.000000e+00 : f32
      %285 = vector.broadcast %cst_60 : f32 to vector<8x128xf32>
      %286 = arith.maximumf %285, %284 : vector<8x128xf32>
      %287 = vector.broadcast %cst_61 : f32 to vector<8x128xf32>
      %288 = arith.minimumf %287, %286 : vector<8x128xf32>
      %289 = vector.broadcast %267 : f32 to vector<8x128xf32>
      %290 = arith.mulf %288, %289 : vector<8x128xf32>
      %291 = arith.subf %275, %290 : vector<8x128xf32>
      %292 = vector.broadcast %270 : f32 to vector<8x128xf32>
      %293 = arith.mulf %288, %292 : vector<8x128xf32>
      %294 = arith.subf %277, %293 : vector<8x128xf32>
      %295 = arith.mulf %291, %291 : vector<8x128xf32>
      %296 = arith.mulf %294, %294 : vector<8x128xf32>
      %297 = arith.addf %295, %296 : vector<8x128xf32>
      %298 = arith.minimumf %258, %297 : vector<8x128xf32>
      %cst_62 = arith.constant -7.000000e+03 : f32
      %299 = vector.broadcast %cst_62 : f32 to vector<8x128xf32>
      %300 = arith.mulf %299, %298 : vector<8x128xf32>
      %301 = math.exp %300 : vector<8x128xf32>
      %cst_63 = arith.constant 1.000000e+00 : f32
      %302 = vector.broadcast %cst_63 : f32 to vector<8x128xf32>
      %303 = arith.select %101, %302, %301 : vector<8x128xi1>, vector<8x128xf32>
      %304 = vector.broadcast %120 : f32 to vector<8x128xf32>
      %305 = arith.mulf %303, %304 : vector<8x128xf32>
      %cst_64 = arith.constant 1.000000e+00 : f32
      %306 = vector.broadcast %cst_64 : f32 to vector<8x128xf32>
      %307 = arith.subf %306, %305 : vector<8x128xf32>
      %308 = arith.mulf %arg12, %307 : vector<8x128xf32>
      scf.yield %126, %128, %308, %145, %162, %179 : vector<8x128xf32>, vector<8x128xi32>, vector<8x128xf32>, vector<8x128xf32>, vector<8x128xf32>, vector<8x128xf32>
    }
    %c16_i32_25 = arith.constant 16 : i32
    %c0_26 = arith.constant 0 : index
    %c0_27 = arith.constant 0 : index
    %39 = vector.load %arg8[%c0_26, %c0_27] : memref<8x128xf32, #tpu.memory_space<vmem>>, vector<8x128xf32>
    tpu.vector_store %arg8[%c0_26, %c0_27], %38#0 {strides = array<i32>} : memref<8x128xf32, #tpu.memory_space<vmem>>, vector<8x128xf32>,
    %c0_28 = arith.constant 0 : index
    %c0_29 = arith.constant 0 : index
    %c0_30 = arith.constant 0 : index
    %40 = vector.load %arg7[%c0_28, %c0_29, %c0_30] : memref<1x8x128xi32, #tpu.memory_space<vmem>>, vector<1x8x128xi32>
    %41 = vector.shape_cast %40 : vector<1x8x128xi32> to vector<8x128xi32>
    %42 = vector.shape_cast %38#1 : vector<8x128xi32> to vector<1x8x128xi32>
    tpu.vector_store %arg7[%c0_28, %c0_29, %c0_30], %42 {strides = array<i32>} : memref<1x8x128xi32, #tpu.memory_space<vmem>>, vector<1x8x128xi32>,
    %c0_31 = arith.constant 0 : index
    %c0_32 = arith.constant 0 : index
    %c0_33 = arith.constant 0 : index
    %43 = vector.load %arg6[%c0_31, %c0_32, %c0_33] : memref<1x8x128xf32, #tpu.memory_space<vmem>>, vector<1x8x128xf32>
    %44 = vector.shape_cast %43 : vector<1x8x128xf32> to vector<8x128xf32>
    %45 = vector.shape_cast %38#2 : vector<8x128xf32> to vector<1x8x128xf32>
    tpu.vector_store %arg6[%c0_31, %c0_32, %c0_33], %45 {strides = array<i32>} : memref<1x8x128xf32, #tpu.memory_space<vmem>>, vector<1x8x128xf32>,
    %c0_34 = arith.constant 0 : index
    %c0_35 = arith.constant 0 : index
    %c0_36 = arith.constant 0 : index
    %c0_37 = arith.constant 0 : index
    %46 = vector.load %arg5[%c0_34, %c0_35, %c0_36, %c0_37] : memref<1x3x8x128xf32, #tpu.memory_space<vmem>>, vector<1x1x8x128xf32>
    %47 = vector.shape_cast %46 : vector<1x1x8x128xf32> to vector<8x128xf32>
    %48 = vector.shape_cast %38#3 : vector<8x128xf32> to vector<1x1x8x128xf32>
    tpu.vector_store %arg5[%c0_34, %c0_35, %c0_36, %c0_37], %48 {strides = array<i32>} : memref<1x3x8x128xf32, #tpu.memory_space<vmem>>, vector<1x1x8x128xf32>,
    %c0_38 = arith.constant 0 : index
    %c1_39 = arith.constant 1 : index
    %c0_40 = arith.constant 0 : index
    %c0_41 = arith.constant 0 : index
    %49 = vector.load %arg5[%c0_38, %c1_39, %c0_40, %c0_41] : memref<1x3x8x128xf32, #tpu.memory_space<vmem>>, vector<1x1x8x128xf32>
    %50 = vector.shape_cast %49 : vector<1x1x8x128xf32> to vector<8x128xf32>
    %51 = vector.shape_cast %38#4 : vector<8x128xf32> to vector<1x1x8x128xf32>
    tpu.vector_store %arg5[%c0_38, %c1_39, %c0_40, %c0_41], %51 {strides = array<i32>} : memref<1x3x8x128xf32, #tpu.memory_space<vmem>>, vector<1x1x8x128xf32>,
    %c0_42 = arith.constant 0 : index
    %c2_43 = arith.constant 2 : index
    %c0_44 = arith.constant 0 : index
    %c0_45 = arith.constant 0 : index
    %52 = vector.load %arg5[%c0_42, %c2_43, %c0_44, %c0_45] : memref<1x3x8x128xf32, #tpu.memory_space<vmem>>, vector<1x1x8x128xf32>
    %53 = vector.shape_cast %52 : vector<1x1x8x128xf32> to vector<8x128xf32>
    %54 = vector.shape_cast %38#5 : vector<8x128xf32> to vector<1x1x8x128xf32>
    tpu.vector_store %arg5[%c0_42, %c2_43, %c0_44, %c0_45], %54 {strides = array<i32>} : memref<1x3x8x128xf32, #tpu.memory_space<vmem>>, vector<1x1x8x128xf32>,
    %c0_i32_46 = arith.constant 0 : i32
    %55 = arith.cmpi eq, %arg3, %c0_i32_46 : i32
    %56 = arith.extui %55 : i1 to i32
    %c0_i32_47 = arith.constant 0 : i32
    %57 = arith.cmpi ne, %56, %c0_i32_47 : i32
    scf.if %57 {
      %c0_48 = arith.constant 0 : index
      %c0_49 = arith.constant 0 : index
      %c0_50 = arith.constant 0 : index
      %58 = vector.load %arg6[%c0_48, %c0_49, %c0_50] : memref<1x8x128xf32, #tpu.memory_space<vmem>>, vector<1x8x128xf32>
      %59 = vector.shape_cast %58 : vector<1x8x128xf32> to vector<8x128xf32>
      %cst_51 = arith.constant 1.000000e+00 : f32
      %60 = vector.broadcast %cst_51 : f32 to vector<8x128xf32>
      %61 = arith.subf %60, %59 : vector<8x128xf32>
      %c0_52 = arith.constant 0 : index
      %c0_53 = arith.constant 0 : index
      %c0_54 = arith.constant 0 : index
      %62 = vector.load %arg6[%c0_52, %c0_53, %c0_54] : memref<1x8x128xf32, #tpu.memory_space<vmem>>, vector<1x8x128xf32>
      %63 = vector.shape_cast %62 : vector<1x8x128xf32> to vector<8x128xf32>
      %64 = vector.shape_cast %61 : vector<8x128xf32> to vector<1x8x128xf32>
      tpu.vector_store %arg6[%c0_52, %c0_53, %c0_54], %64 {strides = array<i32>} : memref<1x8x128xf32, #tpu.memory_space<vmem>>, vector<1x8x128xf32>,
      %c0_55 = arith.constant 0 : index
      %c0_56 = arith.constant 0 : index
      %c0_57 = arith.constant 0 : index
      %65 = vector.load %arg7[%c0_55, %c0_56, %c0_57] : memref<1x8x128xi32, #tpu.memory_space<vmem>>, vector<1x8x128xi32>
      %66 = vector.shape_cast %65 : vector<1x8x128xi32> to vector<8x128xi32>
      %c12_i32 = arith.constant 12 : i32
      %67 = vector.broadcast %c12_i32 : i32 to vector<8x128xi32>
      %68 = arith.cmpi sge, %66, %67 : vector<8x128xi32>
      %c0_58 = arith.constant 0 : index
      %c0_59 = arith.constant 0 : index
      %c0_60 = arith.constant 0 : index
      %69 = vector.load %arg7[%c0_58, %c0_59, %c0_60] : memref<1x8x128xi32, #tpu.memory_space<vmem>>, vector<1x8x128xi32>
      %70 = vector.shape_cast %69 : vector<1x8x128xi32> to vector<8x128xi32>
      %c-1_i32 = arith.constant -1 : i32
      %71 = vector.broadcast %c-1_i32 : i32 to vector<8x128xi32>
      %72 = arith.select %68, %71, %70 : vector<8x128xi1>, vector<8x128xi32>
      %c0_61 = arith.constant 0 : index
      %c0_62 = arith.constant 0 : index
      %c0_63 = arith.constant 0 : index
      %73 = vector.load %arg7[%c0_61, %c0_62, %c0_63] : memref<1x8x128xi32, #tpu.memory_space<vmem>>, vector<1x8x128xi32>
      %74 = vector.shape_cast %73 : vector<1x8x128xi32> to vector<8x128xi32>
      %75 = vector.shape_cast %72 : vector<8x128xi32> to vector<1x8x128xi32>
      tpu.vector_store %arg7[%c0_61, %c0_62, %c0_63], %75 {strides = array<i32>} : memref<1x8x128xi32, #tpu.memory_space<vmem>>, vector<1x8x128xi32>,
    } else {
    }
    return
  }
  func.func @transform_0(%arg0: i32, %arg1: i32, %arg2: i32, %arg3: i32) -> (i32, i32, i32) {
    %c0_i32 = arith.constant 0 : i32
    %c0_i32_0 = arith.constant 0 : i32
    %c0_i32_1 = arith.constant 0 : i32
    %c0_i32_2 = arith.constant 0 : i32
    return %c0_i32, %c0_i32_0, %c0_i32_1 : i32, i32, i32
  }
  func.func @transform_1(%arg0: i32, %arg1: i32, %arg2: i32, %arg3: i32) -> (i32, i32, i32, i32) {
    %c0_i32 = arith.constant 0 : i32
    %c0_i32_0 = arith.constant 0 : i32
    return %arg0, %c0_i32, %arg1, %arg2 : i32, i32, i32, i32
  }
  func.func @transform_2(%arg0: i32, %arg1: i32, %arg2: i32, %arg3: i32) -> (i32, i32, i32) {
    %c0_i32 = arith.constant 0 : i32
    return %arg0, %arg1, %arg2 : i32, i32, i32
  }
  func.func @transform_3(%arg0: i32, %arg1: i32, %arg2: i32, %arg3: i32) -> (i32, i32, i32) {
    %c0_i32 = arith.constant 0 : i32
    return %arg0, %arg1, %arg2 : i32, i32, i32
  }
}

</mosaic_0001>

<llo_original>
// kernel: tpu_custom_call.1
$region0: #{tpu_custom_call.1}
  #allocation0 [shape = 'u32[]', space=smem, size = 0x4, offset = 0x4, fixed_abs, tag = 'smem constant byte address 0x4 - core index']
  #allocation1 [shape = 'u32[144,128]{1,0:T(1,128)}', space=vmem, size = 0x12000, scoped, tag = 'internal scratch']
  #allocation2 [shape = 'f32[8,128]{1,0:T(8,128)}', space=vmem, size = 0x1000, scoped, tag = 'scratch operand']
  %s0 = inlined_call_operand.vmem [shape: f32[2,34,16], index: 0, kind: input, shape index: {}]
  %s1 = inlined_call_operand.hbm [shape: f32[2,3,16,128], index: 1, kind: output, shape index: {0}]
  %s2 = inlined_call_operand.hbm [shape: f32[2,16,128], index: 2, kind: output, shape index: {1}]
  %s3 = inlined_call_operand.hbm [shape: s32[2,16,128], index: 3, kind: output, shape index: {2}]
  %4 = xla_tuple %s1, %s2, %s3
  %s5 = sld [smem:[#allocation0]]
  $region72: #{tpu_custom_call.1} parent=0
    _
  %s7 = ssub.s32 1, %s5
  %s8 = scalar_select 0, %s7, %s5
  $region1: #{tpu_custom_call.1} parent=0
    #allocation3 [shape = 'u8[40960]{0}', space=smem, size = 0xa000, scoped, tag = 'input window, operand 0, single buffered']
    #allocation4 [shape = 's32[2]{0}', space=sflag, size = 0x8, scoped, tag = 'scoped memory for tpu_custom_call.1']
    #allocation5 [shape = 's32[2]{0}', space=sflag, size = 0x8, scoped, tag = 'scoped memory for tpu_custom_call.1']
    #allocation6 [shape = 'u8[24576]{0}', space=vmem, size = 0x6000, scoped, tag = 'output window, operand 0']
    #allocation7 [shape = 'u8[8192]{0}', space=vmem, size = 0x2000, scoped, tag = 'output window, operand 1']
    #allocation8 [shape = 's32[2]{0}', space=sflag, size = 0x8, scoped, tag = 'scoped memory for tpu_custom_call.1']
    #allocation9 [shape = 'u8[8192]{0}', space=vmem, size = 0x2000, scoped, tag = 'output window, operand 2']
    %9 = vsyncpa [#allocation5], 0
    %10 = vsyncpa [#allocation4], 0
    %s11 = scalar_lea.sflag [#allocation4], 1
    %12 = vsyncpa %s11, 0
    %13 = vsyncpa [#allocation8], 0
    %s14 = scalar_lea.sflag [#allocation8], 1
    %15 = vsyncpa %s14, 0
    loop: start=0, step=1, limit=6
    $region2: #{tpu_custom_call.1} parent=1 // loop_pre_header
      _
    $region3: #{tpu_custom_call.1} parent=1 // loop_header
      %s17 = sphi 0, %s21
      %p18 = scmp.ge.s32.totalorder %s17, 6
      %s24 = sphi 0, %s50
      %s25 = sphi 0, %s46
      %s26 = sphi 0, %s42
      %s27 = sphi 0, %s38
      %s28 = sphi 0, %s24
      %s29 = sphi 0, %s25
      %s30 = sphi 0, %s26
      %s31 = sphi 0, %s27
      %s32 = sphi 0, %s28
      %s33 = sphi 0, %s29
      %s34 = sphi 0, %s30
      %s35 = sphi 0, %s31
      %s51 = sphi 0, %s51
      %s53 = sphi 0, %s51
      %s54 = sphi 0, %s53
      %s68 = sphi 0, %s54
      %s78 = sphi 0, %s80
      %s81 = sphi 0, %s78
      %s82 = sphi 0, %s81
      %s98 = sphi 0, %s82
      %s108 = sphi 0, %s110
      %s111 = sphi 0, %s108
      %s112 = sphi 0, %s111
      %s128 = sphi 0, %s112
      %s138 = sphi 0, %s140
      %s141 = sphi 0, %s138
      %s142 = sphi 0, %s141
      %s158 = sphi 0, %s142
    $region4: #{tpu_custom_call.1} parent=1 // loop_header_branch
      %20 = sbr.rel (%p18) target = $region8
    $region5: #{tpu_custom_call.1} parent=1 // loop_body
      %s22 = ssub.s32 %s17, 1
      %s23 = ssub.s32 %s17, 2
      %s36 = sadd.s32 1, %s27
      %p37 = scmp.ge.s32.totalorder %s36, 1
      %s38 = scalar_select %p37, 0, %s36
      %s39 = sadd.s32 1, %s26
      %s40 = scalar_select %p37, %s39, %s26
      %p41 = scmp.ge.s32.totalorder %s40, 1
      %s42 = scalar_select %p41, 0, %s40
      %s43 = sadd.s32 1, %s25
      %s44 = scalar_select %p41, %s43, %s25
      %p45 = scmp.ge.s32.totalorder %s44, 2
      %s46 = scalar_select %p45, 0, %s44
      %s47 = sadd.s32 1, %s24
      %s48 = scalar_select %p45, %s47, %s24
      %p49 = scmp.ge.s32.totalorder %s48, 2
      %s50 = scalar_select %p49, 0, %s48
      %s52 = sadd.s32 %s51, 1
      %p55 = scmp.eq.s32.totalorder %s17, 3
      %p56 = scmp.ne.s32.totalorder %s51, %s53
      %p57 = scmp.eq.s32.totalorder %s17, 0
      %p58 = por %p56, %p57
      %p59 = scmp.ne.s32.totalorder %s51, %s53
      %p60 = scmp.eq.s32.totalorder %s22, 3
      %p61 = por %p59, %p60
      %p62 = scmp.ne.s32.totalorder %s53, %s54
      %p63 = scmp.eq.s32.totalorder %s22, 0
      %p64 = por %p62, %p63
      %p65 = scmp.ne.s32.totalorder %s53, %s54
      %p66 = scmp.eq.s32.totalorder %s23, 3
      %p67 = por %p65, %p66
      %p69 = scmp.ne.s32.totalorder %s54, %s68
      %p70 = scmp.eq.s32.totalorder %s23, 0
      %p71 = por %p69, %p70
      %s72 = ssub.s32 %s24, %s50
      %s73 = ssub.s32 %s25, %s46
      %s74 = sor.u32 %s72, %s73
      %s75 = ssub.s32 %s26, %s42
      %s76 = sor.u32 %s74, %s75
      %p77 = scmp.eq.s32.totalorder %s76, 0
      %s79 = sadd.s32 %s78, 1
      %s80 = scalar_select %p77, %s78, %s79
      %p83 = pneg %p77
      %p84 = scmp.eq.s32.totalorder %s17, 3
      %p85 = por %p83, %p84
      %p86 = scmp.ne.s32.totalorder %s78, %s81
      %p87 = scmp.eq.s32.totalorder %s17, 0
      %p88 = por %p86, %p87
      %p89 = scmp.ne.s32.totalorder %s78, %s81
      %p90 = scmp.eq.s32.totalorder %s22, 3
      %p91 = por %p89, %p90
      %p92 = scmp.ne.s32.totalorder %s81, %s82
      %p93 = scmp.eq.s32.totalorder %s22, 0
      %p94 = por %p92, %p93
      %p95 = scmp.ne.s32.totalorder %s81, %s82
      %p96 = scmp.eq.s32.totalorder %s23, 3
      %p97 = por %p95, %p96
      %p99 = scmp.ne.s32.totalorder %s82, %s98
      %p100 = scmp.eq.s32.totalorder %s23, 0
      %p101 = por %p99, %p100
      %s102 = ssub.s32 %s24, %s50
      %s103 = ssub.s32 %s25, %s46
      %s104 = sor.u32 %s102, %s103
      %s105 = ssub.s32 %s26, %s42
      %s106 = sor.u32 %s104, %s105
      %p107 = scmp.eq.s32.totalorder %s106, 0
      %s109 = sadd.s32 %s108, 1
      %s110 = scalar_select %p107, %s108, %s109
      %p113 = pneg %p107
      %p114 = scmp.eq.s32.totalorder %s17, 3
      %p115 = por %p113, %p114
      %p116 = scmp.ne.s32.totalorder %s108, %s111
      %p117 = scmp.eq.s32.totalorder %s17, 0
      %p118 = por %p116, %p117
      %p119 = scmp.ne.s32.totalorder %s108, %s111
      %p120 = scmp.eq.s32.totalorder %s22, 3
      %p121 = por %p119, %p120
      %p122 = scmp.ne.s32.totalorder %s111, %s112
      %p123 = scmp.eq.s32.totalorder %s22, 0
      %p124 = por %p122, %p123
      %p125 = scmp.ne.s32.totalorder %s111, %s112
      %p126 = scmp.eq.s32.totalorder %s23, 3
      %p127 = por %p125, %p126
      %p129 = scmp.ne.s32.totalorder %s112, %s128
      %p130 = scmp.eq.s32.totalorder %s23, 0
      %p131 = por %p129, %p130
      %s132 = ssub.s32 %s24, %s50
      %s133 = ssub.s32 %s25, %s46
      %s134 = sor.u32 %s132, %s133
      %s135 = ssub.s32 %s26, %s42
      %s136 = sor.u32 %s134, %s135
      %p137 = scmp.eq.s32.totalorder %s136, 0
      %s139 = sadd.s32 %s138, 1
      %s140 = scalar_select %p137, %s138, %s139
      %p143 = pneg %p137
      %p144 = scmp.eq.s32.totalorder %s17, 3
      %p145 = por %p143, %p144
      %p146 = scmp.ne.s32.totalorder %s138, %s141
      %p147 = scmp.eq.s32.totalorder %s17, 0
      %p148 = por %p146, %p147
      %p149 = scmp.ne.s32.totalorder %s138, %s141
      %p150 = scmp.eq.s32.totalorder %s22, 3
      %p151 = por %p149, %p150
      %p152 = scmp.ne.s32.totalorder %s141, %s142
      %p153 = scmp.eq.s32.totalorder %s22, 0
      %p154 = por %p152, %p153
      %p155 = scmp.ne.s32.totalorder %s141, %s142
      %p156 = scmp.eq.s32.totalorder %s23, 3
      %p157 = por %p155, %p156
      %p159 = scmp.ne.s32.totalorder %s142, %s158
      %p160 = scmp.eq.s32.totalorder %s23, 0
      %p161 = por %p159, %p160
      %p162 = scmp.le.s32.totalorder 1, %s17
      %p163 = scmp.lt.s32.totalorder %s17, 5
      %p164 = pnand %p162, %p163
      %p165 = pneg %p164
      // Predicated region
      $region9: #{tpu_custom_call.1} parent=5 // pred_check
        _
      $region10: #{tpu_custom_call.1} parent=5 // pred_check_branch
        %167 = sbr.rel (%p164) target = $region12
      $region11: #{tpu_custom_call.1} parent=5 // pred_region
        %s168 = ssub.s32 %s17, 1
        // Predicated region
        $region13: #{tpu_custom_call.1} parent=11 // pred_check
          %p169 = pneg %p64
        $region14: #{tpu_custom_call.1} parent=11 // pred_check_branch
          %171 = sbr.rel (%p169) target = $region16
        $region15: #{tpu_custom_call.1} parent=11 // pred_region
          %s173 = ssub.s32 1280, 1280
          %174 = vsyncadd [#allocation5], %s173
          %s175 = sshll.u32 %s0, 4
          %s176 = int_to_ptr.vmem [resolvable:$true] %s175
          %181 = dma.vmem_to_smem %s176, 1280, [#allocation3], [#allocation5], 128, 128, 8
        $region16: #{tpu_custom_call.1} parent=11 // pred_fallthru
          _
      $region12: #{tpu_custom_call.1} parent=5 // pred_fallthru
        _
      %p182 = scmp.lt.s32.totalorder %s17, 4
      // Predicated region
      $region17: #{tpu_custom_call.1} parent=5 // pred_check
        %p183 = pneg %p182
      $region18: #{tpu_custom_call.1} parent=5 // pred_check_branch
        %185 = sbr.rel (%p183) target = $region20
      $region19: #{tpu_custom_call.1} parent=5 // pred_region
        _
      $region20: #{tpu_custom_call.1} parent=5 // pred_fallthru
        _
      %p186 = scmp.le.s32.totalorder 1, %s17
      %p187 = scmp.lt.s32.totalorder %s17, 5
      %p188 = pnand %p186, %p187
      %p189 = pneg %p188
      // Predicated region
      $region21: #{tpu_custom_call.1} parent=5 // pred_check
        _
      $region22: #{tpu_custom_call.1} parent=5 // pred_check_branch
        %191 = sbr.rel (%p188) target = $region24
      $region23: #{tpu_custom_call.1} parent=5 // pred_region
        %s192 = ssub.s32 %s17, 1
        // Predicated region
        $region25: #{tpu_custom_call.1} parent=23 // pred_check
          %p193 = pneg %p64
        $region26: #{tpu_custom_call.1} parent=23 // pred_check_branch
          %195 = sbr.rel (%p193) target = $region28
        $region27: #{tpu_custom_call.1} parent=23 // pred_region
          %196 = dma.done [#allocation5], 1280
        $region28: #{tpu_custom_call.1} parent=23 // pred_fallthru
          _
        %197 = sfence
        %p198 = pneg %p64
        %p199 = pneg %p61
        %p200 = pneg %p94
        %p201 = pneg %p91
        %s202 = sand.u32 %s81, 1
        %s203 = scalar_lea.sflag [#allocation4], %s202
        %s204 = sand.u32 %s81, 1
        %s205 = smul.addr %s204, 24
        %s206 = scalar_lea.vmem [#allocation6], %s205
        %p207 = pneg %p124
        %p208 = pneg %p121
        %s209 = sand.u32 %s22, 1
        %s210 = scalar_lea.sflag [#allocation8], %s209
        %s211 = sand.u32 %s111, 1
        %s212 = smul.addr %s211, 8
        %s213 = scalar_lea.vmem [#allocation7], %s212
        %p214 = pneg %p154
        %p215 = pneg %p151
        %s216 = sand.u32 %s22, 1
        %s217 = scalar_lea.sflag [#allocation8], %s216
        %s218 = sand.u32 %s141, 1
        %s219 = smul.addr %s218, 8
        %s220 = scalar_lea.vmem [#allocation9], %s219
        %s221 = smul.u32 %s29, 8
        %s222 = smul.u32 %s30, 128
        %v223 = vlaneseq
        %v224 = vshrl.u32 %v223, 7
        %v225 = vstv %s221
        %v226 = vadd.s32 %v225, %v224
        %v227 = vlaneseq
        %v228 = vand.u32 %v227, 127
        %v229 = vstv %s222
        %v230 = vadd.s32 %v229, %v228
        %v231 = vcvt.s32.f32 %v230
        %v232 = vadd.f32 %v231, 0.5
        %v233 = vmul.f32 %v232, 0.125
        %v234 = vsub.f32 %v233, 1.0
        %v235 = vcvt.s32.f32 %v226
        %v236 = vadd.f32 %v235, 0.5
        %v237 = vmul.f32 %v236, 0.125
        %v238 = vsub.f32 1.0, %v237
        %p239 = scmp.eq.s32.totalorder %s31, 0
        // Predicated region
        $region29: #{tpu_custom_call.1} parent=23 // pred_check
          %p240 = pneg %p239
        $region30: #{tpu_custom_call.1} parent=23 // pred_check_branch
          %242 = sbr.rel (%p240) target = $region32
        $region31: #{tpu_custom_call.1} parent=23 // pred_region
          %243 = vst [vmem:[#allocation2] sm:$0xff] -1e+30
          %244 = vst [vmem:[%s220] sm:$0xff] 12
          %245 = vst [vmem:[%s213] sm:$0xff] 1.0
          %246 = vst [vmem:[%s206] sm:$0xff] 0.0
          %247 = vst [vmem:[%s206 + $0x8] sm:$0xff] 0.0
          %248 = vst [vmem:[%s206 + $0x10] sm:$0xff] 0.0
        $region32: #{tpu_custom_call.1} parent=23 // pred_fallthru
          _
        %v249 = vld [vmem:[#allocation2] sm:$0xff]
        %v250 = vld [vmem:[%s220] sm:$0xff]
        %v251 = vld [vmem:[%s213] sm:$0xff]
        %v252 = vld [vmem:[%s206] sm:$0xff]
        %s253 = scalar_lea.vmem %s206, 8 [#allocation6]
        %v254 = vld [vmem:[%s253] sm:$0xff]
        %s255 = scalar_lea.vmem %s206, 16 [#allocation6]
        %v256 = vld [vmem:[%s255] sm:$0xff]
        %s257 = smul.u32 %s31, 16
        loop: start=0, step=1, limit=16
        $region33: #{tpu_custom_call.1} parent=23 // loop_pre_header
          _
        $region34: #{tpu_custom_call.1} parent=23 // loop_header
          %s259 = sphi 0, %s263
          %p260 = scmp.ge.s32.totalorder %s259, 16
          %v264 = vphi %v249, %v360
          %v265 = vphi %v250, %v362
          %v266 = vphi %v251, %v576
          %v267 = vphi %v252, %v385
          %v268 = vphi %v254, %v408
          %v269 = vphi %v256, %v431
        $region35: #{tpu_custom_call.1} parent=23 // loop_header_branch
          %262 = sbr.rel (%p260) target = $region39
        $region36: #{tpu_custom_call.1} parent=23 // loop_body
          %s270 = sadd.s32 %s257, %s259
          %s271 = sshra.s32 %s270, 7
          %s272 = sand.u32 %s270, 127
          %s273 = smul.u32 %s28, 40
          %s274 = sadd.s32 %s271, %s273
          %s275 = smul.u32 %s274, 128
          %s276 = sshra.s32 %s270, 7
          %s277 = sand.u32 %s270, 127
          %s278 = sadd.s32 %s275, %s277
          %s279 = sld [smem:[#allocation3 + %s278]]
          %v280 = vstv %s279
          %v281 = vmul.f32 %v280, %v234
          %s282 = sadd.s32 %s271, 1
          %s283 = sadd.s32 %s282, %s273
          %s284 = smul.u32 %s283, 128
          %s285 = sadd.s32 %s284, %s277
          %s286 = sld [smem:[#allocation3 + %s285]]
          %v287 = vstv %s286
          %v288 = vmul.f32 %v287, %v238
          %v289 = vadd.f32 %v281, %v288
          %s290 = sadd.s32 %s271, 2
          %s291 = sadd.s32 %s290, %s273
          %s292 = smul.u32 %s291, 128
          %s293 = sadd.s32 %s292, %s277
          %s294 = sld [smem:[#allocation3 + %s293]]
          %v295 = vstv %s294
          %v296 = vadd.f32 %v289, %v295
          %s297 = sadd.s32 %s271, 3
          %s298 = sadd.s32 %s297, %s273
          %s299 = smul.u32 %s298, 128
          %s300 = sadd.s32 %s299, %s277
          %s301 = sld [smem:[#allocation3 + %s300]]
          %v302 = vstv %s301
          %v303 = vmul.f32 %v302, %v234
          %s304 = sadd.s32 %s271, 4
          %s305 = sadd.s32 %s304, %s273
          %s306 = smul.u32 %s305, 128
          %s307 = sadd.s32 %s306, %s277
          %s308 = sld [smem:[#allocation3 + %s307]]
          %v309 = vstv %s308
          %v310 = vmul.f32 %v309, %v238
          %v311 = vadd.f32 %v303, %v310
          %s312 = sadd.s32 %s271, 5
          %s313 = sadd.s32 %s312, %s273
          %s314 = smul.u32 %s313, 128
          %s315 = sadd.s32 %s314, %s277
          %s316 = sld [smem:[#allocation3 + %s315]]
          %v317 = vstv %s316
          %v318 = vadd.f32 %v311, %v317
          %v319 = vsub.f32 1.0, %v296
          %v320 = vsub.f32 %v319, %v318
          %vm321 = vcmp.ge.f32.partialorder %v296, 0.0
          %vm322 = vcmp.ge.f32.partialorder %v318, 0.0
          %vm323 = vmand %vm321, %vm322
          %vm324 = vcmp.ge.f32.partialorder %v320, 0.0
          %vm325 = vmand %vm323, %vm324
          %s326 = sadd.s32 %s271, 6
          %s327 = sadd.s32 %s326, %s273
          %s328 = smul.u32 %s327, 128
          %s329 = sadd.s32 %s328, %s277
          %s330 = sld [smem:[#allocation3 + %s329]]
          %v331 = vstv %s330
          %v332 = vmul.f32 %v331, %v234
          %s333 = sadd.s32 %s271, 7
          %s334 = sadd.s32 %s333, %s273
          %s335 = smul.u32 %s334, 128
          %s336 = sadd.s32 %s335, %s277
          %s337 = sld [smem:[#allocation3 + %s336]]
          %v338 = vstv %s337
          %v339 = vmul.f32 %v338, %v238
          %v340 = vadd.f32 %v332, %v339
          %s341 = sadd.s32 %s271, 8
          %s342 = sadd.s32 %s341, %s273
          %s343 = smul.u32 %s342, 128
          %s344 = sadd.s32 %s343, %s277
          %s345 = sld [smem:[#allocation3 + %s344]]
          %v346 = vstv %s345
          %v347 = vadd.f32 %v340, %v346
          %s348 = sadd.s32 %s271, 9
          %s349 = sadd.s32 %s348, %s273
          %s350 = smul.u32 %s349, 128
          %s351 = sadd.s32 %s350, %s277
          %s352 = sld [smem:[#allocation3 + %s351]]
          %p353 = scmp.gt.f32.partialorder %s352, 0.5
          %s354 = scalar_select %p353, 1, 0
          %v355 = vstv %s354
          %vm356 = vcmp.eq.s32.totalorder %v355, 1
          %vm357 = vmand %vm325, %vm356
          %vm358 = vcmp.gt.f32.partialorder %v347, %v264
          %vm359 = vmand %vm357, %vm358
          %v360 = vsel %vm359, %v347, %v264
          %v361 = vstv %s270
          %v362 = vsel %vm359, %v361, %v265
          %s363 = sadd.s32 %s271, 10
          %s364 = sadd.s32 %s363, %s273
          %s365 = smul.u32 %s364, 128
          %s366 = sadd.s32 %s365, %s277
          %s367 = sld [smem:[#allocation3 + %s366]]
          %v368 = vstv %s367
          %v369 = vmul.f32 %v368, %v234
          %s370 = sadd.s32 %s271, 11
          %s371 = sadd.s32 %s370, %s273
          %s372 = smul.u32 %s371, 128
          %s373 = sadd.s32 %s372, %s277
          %s374 = sld [smem:[#allocation3 + %s373]]
          %v375 = vstv %s374
          %v376 = vmul.f32 %v375, %v238
          %v377 = vadd.f32 %v369, %v376
          %s378 = sadd.s32 %s271, 12
          %s379 = sadd.s32 %s378, %s273
          %s380 = smul.u32 %s379, 128
          %s381 = sadd.s32 %s380, %s277
          %s382 = sld [smem:[#allocation3 + %s381]]
          %v383 = vstv %s382
          %v384 = vadd.f32 %v377, %v383
          %v385 = vsel %vm359, %v384, %v267
          %s386 = sadd.s32 %s271, 13
          %s387 = sadd.s32 %s386, %s273
          %s388 = smul.u32 %s387, 128
          %s389 = sadd.s32 %s388, %s277
          %s390 = sld [smem:[#allocation3 + %s389]]
          %v391 = vstv %s390
          %v392 = vmul.f32 %v391, %v234
          %s393 = sadd.s32 %s271, 14
          %s394 = sadd.s32 %s393, %s273
          %s395 = smul.u32 %s394, 128
          %s396 = sadd.s32 %s395, %s277
          %s397 = sld [smem:[#allocation3 + %s396]]
          %v398 = vstv %s397
          %v399 = vmul.f32 %v398, %v238
          %v400 = vadd.f32 %v392, %v399
          %s401 = sadd.s32 %s271, 15
          %s402 = sadd.s32 %s401, %s273
          %s403 = smul.u32 %s402, 128
          %s404 = sadd.s32 %s403, %s277
          %s405 = sld [smem:[#allocation3 + %s404]]
          %v406 = vstv %s405
          %v407 = vadd.f32 %v400, %v406
          %v408 = vsel %vm359, %v407, %v268
          %s409 = sadd.s32 %s271, 16
          %s410 = sadd.s32 %s409, %s273
          %s411 = smul.u32 %s410, 128
          %s412 = sadd.s32 %s411, %s277
          %s413 = sld [smem:[#allocation3 + %s412]]
          %v414 = vstv %s413
          %v415 = vmul.f32 %v414, %v234
          %s416 = sadd.s32 %s271, 17
          %s417 = sadd.s32 %s416, %s273
          %s418 = smul.u32 %s417, 128
          %s419 = sadd.s32 %s418, %s277
          %s420 = sld [smem:[#allocation3 + %s419]]
          %v421 = vstv %s420
          %v422 = vmul.f32 %v421, %v238
          %v423 = vadd.f32 %v415, %v422
          %s424 = sadd.s32 %s271, 18
          %s425 = sadd.s32 %s424, %s273
          %s426 = smul.u32 %s425, 128
          %s427 = sadd.s32 %s426, %s277
          %s428 = sld [smem:[#allocation3 + %s427]]
          %v429 = vstv %s428
          %v430 = vadd.f32 %v423, %v429
          %v431 = vsel %vm359, %v430, %v269
          %s432 = sadd.s32 %s271, 19
          %s433 = sadd.s32 %s432, %s273
          %s434 = smul.u32 %s433, 128
          %s435 = sadd.s32 %s434, %s277
          %s436 = sld [smem:[#allocation3 + %s435]]
          %s437 = sadd.s32 %s271, 20
          %s438 = sadd.s32 %s437, %s273
          %s439 = smul.u32 %s438, 128
          %s440 = sadd.s32 %s439, %s277
          %s441 = sld [smem:[#allocation3 + %s440]]
          %s442 = sadd.s32 %s271, 21
          %s443 = sadd.s32 %s442, %s273
          %s444 = smul.u32 %s443, 128
          %s445 = sadd.s32 %s444, %s277
          %s446 = sld [smem:[#allocation3 + %s445]]
          %s447 = sadd.s32 %s271, 22
          %s448 = sadd.s32 %s447, %s273
          %s449 = smul.u32 %s448, 128
          %s450 = sadd.s32 %s449, %s277
          %s451 = sld [smem:[#allocation3 + %s450]]
          %s452 = sadd.s32 %s271, 23
          %s453 = sadd.s32 %s452, %s273
          %s454 = smul.u32 %s453, 128
          %s455 = sadd.s32 %s454, %s277
          %s456 = sld [smem:[#allocation3 + %s455]]
          %v457 = vstv %s436
          %v458 = vsub.f32 %v234, %v457
          %v459 = vstv %s441
          %v460 = vsub.f32 %v238, %v459
          %v461 = vstv %s446
          %v462 = vmul.f32 %v458, %v461
          %v463 = vstv %s451
          %v464 = vmul.f32 %v460, %v463
          %v465 = vadd.f32 %v462, %v464
          %v466 = vstv %s456
          %v467 = vmul.f32 %v465, %v466
          %v468 = vmax.f32 %v467, 0.0
          %v469 = vmin.f32 %v468, 1.0
          %v470 = vmul.f32 %v469, %v461
          %v471 = vsub.f32 %v458, %v470
          %v472 = vmul.f32 %v469, %v463
          %v473 = vsub.f32 %v460, %v472
          %v474 = vmul.f32 %v471, %v471
          %v475 = vmul.f32 %v473, %v473
          %v476 = vadd.f32 %v474, %v475
          %s477 = sadd.s32 %s271, 24
          %s478 = sadd.s32 %s477, %s273
          %s479 = smul.u32 %s478, 128
          %s480 = sadd.s32 %s479, %s277
          %s481 = sld [smem:[#allocation3 + %s480]]
          %s482 = sadd.s32 %s271, 25
          %s483 = sadd.s32 %s482, %s273
          %s484 = smul.u32 %s483, 128
          %s485 = sadd.s32 %s484, %s277
          %s486 = sld [smem:[#allocation3 + %s485]]
          %s487 = sadd.s32 %s271, 26
          %s488 = sadd.s32 %s487, %s273
          %s489 = smul.u32 %s488, 128
          %s490 = sadd.s32 %s489, %s277
          %s491 = sld [smem:[#allocation3 + %s490]]
          %s492 = sadd.s32 %s271, 27
          %s493 = sadd.s32 %s492, %s273
          %s494 = smul.u32 %s493, 128
          %s495 = sadd.s32 %s494, %s277
          %s496 = sld [smem:[#allocation3 + %s495]]
          %s497 = sadd.s32 %s271, 28
          %s498 = sadd.s32 %s497, %s273
          %s499 = smul.u32 %s498, 128
          %s500 = sadd.s32 %s499, %s277
          %s501 = sld [smem:[#allocation3 + %s500]]
          %v502 = vstv %s481
          %v503 = vsub.f32 %v234, %v502
          %v504 = vstv %s486
          %v505 = vsub.f32 %v238, %v504
          %v506 = vstv %s491
          %v507 = vmul.f32 %v503, %v506
          %v508 = vstv %s496
          %v509 = vmul.f32 %v505, %v508
          %v510 = vadd.f32 %v507, %v509
          %v511 = vstv %s501
          %v512 = vmul.f32 %v510, %v511
          %v513 = vmax.f32 %v512, 0.0
          %v514 = vmin.f32 %v513, 1.0
          %v515 = vmul.f32 %v514, %v506
          %v516 = vsub.f32 %v503, %v515
          %v517 = vmul.f32 %v514, %v508
          %v518 = vsub.f32 %v505, %v517
          %v519 = vmul.f32 %v516, %v516
          %v520 = vmul.f32 %v518, %v518
          %v521 = vadd.f32 %v519, %v520
          %v522 = vmin.f32 %v476, %v521
          %s523 = sadd.s32 %s271, 29
          %s524 = sadd.s32 %s523, %s273
          %s525 = smul.u32 %s524, 128
          %s526 = sadd.s32 %s525, %s277
          %s527 = sld [smem:[#allocation3 + %s526]]
          %s528 = sadd.s32 %s271, 30
          %s529 = sadd.s32 %s528, %s273
          %s530 = smul.u32 %s529, 128
          %s531 = sadd.s32 %s530, %s277
          %s532 = sld [smem:[#allocation3 + %s531]]
          %s533 = sadd.s32 %s271, 31
          %s534 = sadd.s32 %s533, %s273
          %s535 = smul.u32 %s534, 128
          %s536 = sadd.s32 %s535, %s277
          %s537 = sld [smem:[#allocation3 + %s536]]
          %s538 = sadd.s32 %s271, 32
          %s539 = sadd.s32 %s538, %s273
          %s540 = smul.u32 %s539, 128
          %s541 = sadd.s32 %s540, %s277
          %s542 = sld [smem:[#allocation3 + %s541]]
          %s543 = sadd.s32 %s271, 33
          %s544 = sadd.s32 %s543, %s273
          %s545 = smul.u32 %s544, 128
          %s546 = sadd.s32 %s545, %s277
          %s547 = sld [smem:[#allocation3 + %s546]]
          %v548 = vstv %s527
          %v549 = vsub.f32 %v234, %v548
          %v550 = vstv %s532
          %v551 = vsub.f32 %v238, %v550
          %v552 = vstv %s537
          %v553 = vmul.f32 %v549, %v552
          %v554 = vstv %s542
          %v555 = vmul.f32 %v551, %v554
          %v556 = vadd.f32 %v553, %v555
          %v557 = vstv %s547
          %v558 = vmul.f32 %v556, %v557
          %v559 = vmax.f32 %v558, 0.0
          %v560 = vmin.f32 %v559, 1.0
          %v561 = vmul.f32 %v560, %v552
          %v562 = vsub.f32 %v549, %v561
          %v563 = vmul.f32 %v560, %v554
          %v564 = vsub.f32 %v551, %v563
          %v565 = vmul.f32 %v562, %v562
          %v566 = vmul.f32 %v564, %v564
          %v567 = vadd.f32 %v565, %v566
          %v568 = vmin.f32 %v522, %v567
          %v569 = vmul.f32 %v568, -7000.0
          %v570 = vmul.f32 %v569, 1.442695
          %v571 = vpow.pop %v570
          %v572 = vsel %vm325, 1.0, %v571
          %v573 = vstv %s352
          %v574 = vmul.f32 %v572, %v573
          %v575 = vsub.f32 1.0, %v574
          %v576 = vmul.f32 %v266, %v575
        $region37: #{tpu_custom_call.1} parent=23 // loop_footer
          %s263 = sadd.s32 1, %s259
        $region38: #{tpu_custom_call.1} parent=23 // loop_footer_branch
          %258 = sbr.rel target = $region34
        $region39: #{tpu_custom_call.1} parent=23 // loop_exit
          _
        %577 = vst [vmem:[#allocation2] sm:$0xff] %v264
        %578 = vst [vmem:[%s220] sm:$0xff] %v265
        %579 = vst [vmem:[%s213] sm:$0xff] %v266
        %580 = vst [vmem:[%s206] sm:$0xff] %v267
        %581 = vst [vmem:[%s253] sm:$0xff] %v268
        %582 = vst [vmem:[%s255] sm:$0xff] %v269
        // Predicated region
        $region40: #{tpu_custom_call.1} parent=23 // pred_check
          %p583 = pneg %p239
        $region41: #{tpu_custom_call.1} parent=23 // pred_check_branch
          %585 = sbr.rel (%p583) target = $region43
        $region42: #{tpu_custom_call.1} parent=23 // pred_region
          %v586 = vld [vmem:[%s213] sm:$0xff]
          %v587 = vsub.f32 1.0, %v586
          %588 = vst [vmem:[%s213] sm:$0xff] %v587
          %v589 = vld [vmem:[%s220] sm:$0xff]
          %vm590 = vcmp.ge.s32.totalorder %v589, 12
          %v591 = vsel %vm590, 4294967295, %v589
          %592 = vst [vmem:[%s220] sm:$0xff] %v591
        $region43: #{tpu_custom_call.1} parent=23 // pred_fallthru
          _
        %s593 = sand.u32 %s81, 1
        %s594 = scalar_lea.sflag [#allocation4], %s593
        %s595 = sand.u32 %s81, 1
        %s596 = smul.addr %s595, 24
        %s597 = scalar_lea.vmem [#allocation6], %s596
        %s598 = sand.u32 %s22, 1
        %s599 = scalar_lea.sflag [#allocation8], %s598
        %s600 = sand.u32 %s111, 1
        %s601 = smul.addr %s600, 8
        %s602 = scalar_lea.vmem [#allocation7], %s601
        %s603 = sand.u32 %s22, 1
        %s604 = scalar_lea.sflag [#allocation8], %s603
        %s605 = sand.u32 %s141, 1
        %s606 = smul.addr %s605, 8
        %s607 = scalar_lea.vmem [#allocation9], %s606
        // Predicated region
        $region44: #{tpu_custom_call.1} parent=23 // pred_check
          %p608 = pneg %p91
        $region45: #{tpu_custom_call.1} parent=23 // pred_check_branch
          %610 = sbr.rel (%p608) target = $region47
        $region46: #{tpu_custom_call.1} parent=23 // pred_region
          %s612 = ssub.s32 384, 384
          %613 = vsyncadd %s594, %s612
          %s614 = sadd.s32 %s30, %s29
          %s615 = smul.addr %s28, 6
          %s616 = sadd.s32 %s614, %s615
          %s617 = smul.addr %s616, 128
          %s618 = scalar_lea.hbm %s1, %s617
          %s619 = sshll.u32 %s597, 4
          %s620 = int_to_ptr.vmem [resolvable:$true] %s619
          %625 = dma.vmem_to_hbm [thread:$0]  %s620, 384, %s618, %s594, 128, 256, 8
        $region47: #{tpu_custom_call.1} parent=23 // pred_fallthru
          _
        // Predicated region
        $region48: #{tpu_custom_call.1} parent=23 // pred_check
          %p626 = pneg %p121
        $region49: #{tpu_custom_call.1} parent=23 // pred_check_branch
          %628 = sbr.rel (%p626) target = $region51
        $region50: #{tpu_custom_call.1} parent=23 // pred_region
          %s630 = ssub.s32 128, 128
          %631 = vsyncadd %s599, %s630
          %s632 = sadd.s32 %s30, %s29
          %s633 = smul.addr %s28, 2
          %s634 = sadd.s32 %s632, %s633
          %s635 = smul.addr %s634, 128
          %s636 = scalar_lea.hbm %s2, %s635
          %s638 = sshll.u32 %s602, 4
          %s639 = int_to_ptr.vmem [resolvable:$true] %s638
          %641 = dma.vmem_to_hbm [thread:$0]  %s639, 128, %s636, %s599
        $region51: #{tpu_custom_call.1} parent=23 // pred_fallthru
          _
        // Predicated region
        $region52: #{tpu_custom_call.1} parent=23 // pred_check
          %p642 = pneg %p151
        $region53: #{tpu_custom_call.1} parent=23 // pred_check_branch
          %644 = sbr.rel (%p642) target = $region55
        $region54: #{tpu_custom_call.1} parent=23 // pred_region
          %s646 = ssub.s32 128, 128
          %647 = vsyncadd %s604, %s646
          %s648 = sadd.s32 %s30, %s29
          %s649 = smul.addr %s28, 2
          %s650 = sadd.s32 %s648, %s649
          %s651 = smul.addr %s650, 128
          %s652 = scalar_lea.hbm %s3, %s651
          %s654 = sshll.u32 %s607, 4
          %s655 = int_to_ptr.vmem [resolvable:$true] %s654
          %657 = dma.vmem_to_hbm [thread:$0]  %s655, 128, %s652, %s604
        $region55: #{tpu_custom_call.1} parent=23 // pred_fallthru
          _
      $region24: #{tpu_custom_call.1} parent=5 // pred_fallthru
        _
      %p658 = scmp.le.s32.totalorder 2, %s17
      // Predicated region
      $region56: #{tpu_custom_call.1} parent=5 // pred_check
        %p659 = pneg %p658
      $region57: #{tpu_custom_call.1} parent=5 // pred_check_branch
        %661 = sbr.rel (%p659) target = $region59
      $region58: #{tpu_custom_call.1} parent=5 // pred_region
        %s662 = ssub.s32 %s17, 2
        // Predicated region
        $region60: #{tpu_custom_call.1} parent=58 // pred_check
          %p663 = pneg %p97
        $region61: #{tpu_custom_call.1} parent=58 // pred_check_branch
          %665 = sbr.rel (%p663) target = $region63
        $region62: #{tpu_custom_call.1} parent=58 // pred_region
          %s666 = sand.u32 %s82, 1
          %s667 = scalar_lea.sflag [#allocation4], %s666
          %s668 = sand.u32 %s82, 1
          %s669 = smul.addr %s668, 24
          %s670 = scalar_lea.vmem [#allocation6], %s669
          %671 = dma.done %s667, 384
        $region63: #{tpu_custom_call.1} parent=58 // pred_fallthru
          _
        // Predicated region
        $region64: #{tpu_custom_call.1} parent=58 // pred_check
          %p672 = pneg %p127
        $region65: #{tpu_custom_call.1} parent=58 // pred_check_branch
          %674 = sbr.rel (%p672) target = $region67
        $region66: #{tpu_custom_call.1} parent=58 // pred_region
          %s675 = sand.u32 %s23, 1
          %s676 = scalar_lea.sflag [#allocation8], %s675
          %s677 = sand.u32 %s112, 1
          %s678 = smul.addr %s677, 8
          %s679 = scalar_lea.vmem [#allocation7], %s678
          %680 = dma.done %s676, 128
        $region67: #{tpu_custom_call.1} parent=58 // pred_fallthru
          _
        // Predicated region
        $region68: #{tpu_custom_call.1} parent=58 // pred_check
          %p681 = pneg %p157
        $region69: #{tpu_custom_call.1} parent=58 // pred_check_branch
          %683 = sbr.rel (%p681) target = $region71
        $region70: #{tpu_custom_call.1} parent=58 // pred_region
          %s684 = sand.u32 %s23, 1
          %s685 = scalar_lea.sflag [#allocation8], %s684
          %s686 = sand.u32 %s142, 1
          %s687 = smul.addr %s686, 8
          %s688 = scalar_lea.vmem [#allocation9], %s687
          %689 = dma.done %s685, 128
        $region71: #{tpu_custom_call.1} parent=58 // pred_fallthru
          _
      $region59: #{tpu_custom_call.1} parent=5 // pred_fallthru
        _
    $region6: #{tpu_custom_call.1} parent=1 // loop_footer
      %s21 = sadd.s32 1, %s17
    $region7: #{tpu_custom_call.1} parent=1 // loop_footer_branch
      %16 = sbr.rel target = $region3
    $region8: #{tpu_custom_call.1} parent=1 // loop_exit
      _
    %690 = vsyncpa [#allocation4], 1
    %s691 = scalar_lea.sflag [#allocation4], 1
    %692 = vsyncpa %s691, 1
    %693 = vsyncpa [#allocation8], 1
    %s694 = scalar_lea.sflag [#allocation8], 1
    %695 = vsyncpa %s694, 1
    %696 = vsyncpa [#allocation5], 1
    %s697 = scalar_lea.sflag [#allocation5], 1
    %698 = vsyncpa %s697, 1

</llo_original>
